<compile_context>
chip_gen: v7x
topology: tpu7x:2x2x1
jax: 0.10.0
libtpu: 0.0.40
codegen_flags: <defaults>
</compile_context>

<pallas_src>
import jax
import jax.numpy as jnp
from jax.experimental import pallas as pl
from jax.experimental.pallas import tpu as pltpu

BN_EPS = 1e-5


def _round_up(x, m):
    return ((x + m - 1) // m) * m


def _pick_units(num_units, rows_per_unit, max_tile_rows):
    """Units (pool groups / samples) per grid block.

    Keeps the output-block row count either equal to the full dim or a multiple
    of 8 (the (8,128) block constraint), keeps the input block under
    max_tile_rows, and gives >= 2 blocks when there is enough work so both v7x
    TensorCores are used (no effect on single-TC v5e/v6e).
    """
    max_units = max(8, max_tile_rows // rows_per_unit)  # multiple of 8
    if num_units < 16:
        return min(num_units, max_units)
    return min(max_units, _round_up(pl.cdiv(num_units, 2), 8))


# ---------------------------------------------------------------------------
# Kernels
# ---------------------------------------------------------------------------

def conv_relu_pool_kernel(x_ref, w_ref, b_ref, o_ref):
    # x: (TM, K) im2col rows in pool-window-major order (8 rows = one 2x2x2
    # window).  Fused: MXU matmul + bias + ReLU + window max -> (TM//8, N).
    acc = jnp.dot(x_ref[...], w_ref[...], preferred_element_type=jnp.float32)
    acc = jnp.maximum(acc + b_ref[...], 0.0)
    tm, n = acc.shape
    o_ref[...] = jnp.max(acc.reshape(tm // 8, 8, n), axis=1).astype(o_ref.dtype)


def conv2_head_kernel(x_ref, w2_ref, b2_ref, w1h_ref, b1h_ref, w2h_ref,
                      bias2_ref, o_ref):
    # x: (32*TB, 864) conv2 im2col rows; per sample: 4 pooling windows x 8
    # positions.  Fused: conv2 matmul + bias + ReLU + 2x2x2 max-pool, then
    # fc1 (with BatchNorm folded into its weights) + ReLU, then fc2 as a VPU
    # multiply + lane reduce -> (TB, 1).
    acc = jnp.dot(x_ref[...], w2_ref[...], preferred_element_type=jnp.float32)
    acc = jnp.maximum(acc + b2_ref[...], 0.0)             # (32*TB, 64)
    tm, n = acc.shape
    tb = tm // 32
    pooled = jnp.max(acc.reshape(tb, 4, 8, n), axis=2)    # (TB, 4, 64)
    feat = pooled.reshape(tb, 4 * n)                       # (TB, 256) lane-dense
    h = jnp.dot(feat, w1h_ref[...], preferred_element_type=jnp.float32)
    h = jnp.maximum(h + b1h_ref[...], 0.0)                 # (TB, 32)
    # TODO(synk): Dropout(p=0.5) is an inference-mode no-op; train-mode masking
    # would use pltpu.prng_seed / pltpu.prng_random_bits.
    out = jnp.sum(h * w2h_ref[...], axis=-1, keepdims=True) + bias2_ref[0]
    o_ref[...] = out.astype(o_ref.dtype)


# ---------------------------------------------------------------------------
# pallas_call wrappers
# ---------------------------------------------------------------------------

def _conv_relu_pool(a, w, b, *, max_tile_rows=4096):
    m, k = a.shape
    n = w.shape[1]
    units = _pick_units(m // 8, 8, max_tile_rows)
    tm = units * 8
    return pl.pallas_call(
        conv_relu_pool_kernel,
        out_shape=jax.ShapeDtypeStruct((m // 8, n), jnp.float32),
        grid_spec=pl.GridSpec(
            grid=(pl.cdiv(m, tm),),
            in_specs=[
                pl.BlockSpec((tm, k), lambda i: (i, 0)),
                pl.BlockSpec((k, n), lambda i: (0, 0)),   # weight resident
                pl.BlockSpec((1, n), lambda i: (0, 0)),   # bias resident
            ],
            out_specs=pl.BlockSpec((units, n), lambda i: (i, 0)),
        ),
        compiler_params=pltpu.CompilerParams(
            dimension_semantics=("parallel",)),
    )(a, w, b)


def _conv2_head(a2, w2, b2, w1h, b1h, w2h, bias2, *, max_tile_rows=1024):
    m, k = a2.shape
    n = w2.shape[1]
    bsz = m // 32
    tb = _pick_units(bsz, 32, max_tile_rows)
    tm = tb * 32
    return pl.pallas_call(
        conv2_head_kernel,
        out_shape=jax.ShapeDtypeStruct((bsz, 1), jnp.float32),
        grid_spec=pl.GridSpec(
            grid=(pl.cdiv(m, tm),),
            in_specs=[
                pl.BlockSpec((tm, k), lambda i: (i, 0)),
                pl.BlockSpec((k, n), lambda i: (0, 0)),              # conv2 w
                pl.BlockSpec((1, n), lambda i: (0, 0)),              # conv2 b
                pl.BlockSpec(w1h.shape, lambda i: (0, 0)),           # fc1 (BN folded)
                pl.BlockSpec((1, w1h.shape[1]), lambda i: (0, 0)),   # fc1 bias
                pl.BlockSpec((1, w2h.shape[1]), lambda i: (0, 0)),   # fc2 row
                pl.BlockSpec(memory_space=pltpu.MemorySpace.SMEM),   # fc2 scalar bias
            ],
            out_specs=pl.BlockSpec((tb, 1), lambda i: (i, 0)),
        ),
        compiler_params=pltpu.CompilerParams(
            dimension_semantics=("parallel",)),
    )(a2, w2, b2, w1h, b1h, w2h, bias2)


# ---------------------------------------------------------------------------
# Wrapper-side layout plumbing (im2col with pool-window-major row order)
# ---------------------------------------------------------------------------

def _im2col_pool_rows(x_cl):
    """x_cl: (B, D, H, W, C) channels-last; k=3, pad=1, then 2x2x2 pool grouping.

    Returns (B * D//2 * H//2 * W//2 * 8, C*27): each group of 8 consecutive rows
    is one pooling window; feature order is (C-major, kd, kh, kw), matching
    torch_conv_weight.reshape(Cout, C*27)."""
    b, d, h, w, c = x_cl.shape
    xp = jnp.pad(x_cl, ((0, 0), (1, 1), (1, 1), (1, 1), (0, 0)))
    cols = []
    for kd in range(3):
        for kh in range(3):
            for kw in range(3):
                cols.append(xp[:, kd:kd + d, kh:kh + h, kw:kw + w, :])
    p = jnp.stack(cols, axis=-1)                                  # (B,D,H,W,C,27)
    k = c * 27
    p = p.reshape(b, d // 2, 2, h // 2, 2, w // 2, 2, k)
    p = p.transpose(0, 1, 3, 5, 2, 4, 6, 7)                       # window-major
    return p.reshape(b * (d // 2) * (h // 2) * (w // 2) * 8, k)


def net4_forward(x, params):
    """x: (B, 1, 8, 8, 4) float32. Inference-mode forward of Net4."""
    (cw1, cb1, cw2, cb2, gamma, beta, rmean, rvar, fw1, fb1, fw2, fb2) = params
    bsz = x.shape[0]

    # --- conv1 + relu + maxpool (one fused kernel) ---------------------------
    x_cl = jnp.transpose(x, (0, 2, 3, 4, 1))                      # (B,8,8,4,1)
    a1 = _im2col_pool_rows(x_cl)                                  # (B*256, 27)
    w1 = cw1.reshape(cw1.shape[0], -1).T                          # (27, 32)
    y1p = _conv_relu_pool(a1, w1, cb1.reshape(1, -1))             # (B*32, 32)
    y1p = y1p.reshape(bsz, 4, 4, 2, 32)                           # channels-last

    # --- inference BatchNorm folded into fc1 (pure wrapper math) -------------
    scale = gamma / jnp.sqrt(rvar + BN_EPS)                       # (64,)
    shift = beta - rmean * scale                                  # (64,)
    fw1_r = fw1.reshape(fw1.shape[0], 64, 4)                      # (32, C, spatial)
    fb1_eff = fb1 + jnp.einsum('ocw,c->o', fw1_r, shift)
    # Kernel packs pooled features as k = window*64 + channel (lane-dense), so
    # permute the fc1 input columns to that order here.
    w1h = (fw1_r * scale[None, :, None]).transpose(2, 1, 0).reshape(256, -1)

    # --- conv2 + relu + maxpool + fc1 + relu + dropout(id) + fc2 (one kernel) -
    a2 = _im2col_pool_rows(y1p)                                   # (B*32, 864)
    w2 = cw2.reshape(cw2.shape[0], -1).T                          # (864, 64)
    return _conv2_head(a2, w2, cb2.reshape(1, -1),
                       w1h, fb1_eff.reshape(1, -1),
                       fw2.reshape(1, -1), fb2.reshape(1))        # (B, 1)


# ---------------------------------------------------------------------------
# Pure-JAX reference (high precision) for correctness check
# ---------------------------------------------------------------------------

def _ref_maxpool3d(y):
    b, c, d, h, w = y.shape
    return y.reshape(b, c, d // 2, 2, h // 2, 2, w // 2, 2).max(axis=(3, 5, 7))


def reference_forward(x, params):
    (cw1, cb1, cw2, cb2, gamma, beta, rmean, rvar, fw1, fb1, fw2, fb2) = params
    dn = ("NCDHW", "OIDHW", "NCDHW")
    hp = jax.lax.Precision.HIGHEST
    y = jax.lax.conv_general_dilated(x, cw1, (1, 1, 1), ((1, 1), (1, 1), (1, 1)),
                                     dimension_numbers=dn, precision=hp)
    y = jax.nn.relu(y + cb1.reshape(1, -1, 1, 1, 1))
    y = _ref_maxpool3d(y)
    y = jax.lax.conv_general_dilated(y, cw2, (1, 1, 1), ((1, 1), (1, 1), (1, 1)),
                                     dimension_numbers=dn, precision=hp)
    y = jax.nn.relu(y + cb2.reshape(1, -1, 1, 1, 1))
    y = _ref_maxpool3d(y)
    sc = (gamma / jnp.sqrt(rvar + BN_EPS)).reshape(1, -1, 1, 1, 1)
    sh = (beta - rmean * gamma / jnp.sqrt(rvar + BN_EPS)).reshape(1, -1, 1, 1, 1)
    y = y * sc + sh
    y = y.reshape(x.shape[0], -1)
    y = jax.nn.relu(jnp.dot(y, fw1.T, precision=hp) + fb1)
    y = jnp.dot(y, fw2.T, precision=hp) + fb2
    return y


if __name__ == "__main__":
    key = jax.random.PRNGKey(0)
    ks = jax.random.split(key, 13)

    B = 2
    # Input implied by fc1 = Linear(64*2*2*1, 32): (B, 1, 8, 8, 4)
    x = jax.random.normal(ks[0], (B, 1, 8, 8, 4), dtype=jnp.float32)

    def u(k, shape, bound):
        return jax.random.uniform(k, shape, jnp.float32, minval=-bound, maxval=bound)

    bnd1 = 1.0 / (1 * 27) ** 0.5
    cw1 = u(ks[1], (32, 1, 3, 3, 3), bnd1)
    cb1 = u(ks[2], (32,), bnd1)
    bnd2 = 1.0 / (32 * 27) ** 0.5
    cw2 = u(ks[3], (64, 32, 3, 3, 3), bnd2)
    cb2 = u(ks[4], (64,), bnd2)
    gamma = jax.random.uniform(ks[5], (64,), jnp.float32, minval=0.5, maxval=1.5)
    beta = u(ks[6], (64,), 0.1)
    rmean = u(ks[7], (64,), 0.1)
    rvar = jax.random.uniform(ks[8], (64,), jnp.float32, minval=0.5, maxval=1.5)
    bf1 = 1.0 / 256 ** 0.5
    fw1 = u(ks[9], (32, 256), bf1)
    fb1 = u(ks[10], (32,), bf1)
    bf2 = 1.0 / 32 ** 0.5
    fw2 = u(ks[11], (1, 32), bf2)
    fb2 = u(ks[12], (1,), bf2)

    params = (cw1, cb1, cw2, cb2, gamma, beta, rmean, rvar, fw1, fb1, fw2, fb2)

    out = jax.jit(net4_forward)(x, params)
    out = jax.block_until_ready(out)
    assert out.shape == (B, 1)

    ref = jax.block_until_ready(reference_forward(x, params))
    err = jnp.max(jnp.abs(out - ref))
    assert jnp.allclose(out, ref, atol=1e-2, rtol=1e-2), (out, ref, err)

    print("KERNEL_OK")
</pallas_src>

<mosaic_0001>
module attributes {stable_mosaic.version = 11 : i64} {
  func.func @conv_relu_pool_kernel(%arg0: i32, %arg1: memref<256x27xf32, #tpu.memory_space<vmem>>, %arg2: memref<27x32xf32, #tpu.memory_space<vmem>>, %arg3: memref<1x32xf32, #tpu.memory_space<vmem>>, %arg4: memref<32x32xf32, #tpu.memory_space<vmem>>) attributes {dimension_semantics = [#tpu.dimension_semantics<parallel>], iteration_bounds = array<i64: 2>, scalar_prefetch = 0 : i64, scratch_operands = 0 : i64, tpu.core_type = #tpu.core_type<tc>, window_params = [{transform_indices = @transform_0, window_bounds = array<i64: 256, 27>}, {pipeline_mode = #tpu.pipeline_mode<synchronous>, transform_indices = @transform_1, window_bounds = array<i64: 27, 32>}, {pipeline_mode = #tpu.pipeline_mode<synchronous>, transform_indices = @transform_2, window_bounds = array<i64: 1, 32>}, {transform_indices = @transform_3, window_bounds = array<i64: 32, 32>}]} {
    %c0 = arith.constant 0 : index
    %c0_0 = arith.constant 0 : index
    %0 = vector.load %arg1[%c0, %c0_0] : memref<256x27xf32, #tpu.memory_space<vmem>>, vector<256x27xf32>
    %c0_1 = arith.constant 0 : index
    %c0_2 = arith.constant 0 : index
    %1 = vector.load %arg2[%c0_1, %c0_2] : memref<27x32xf32, #tpu.memory_space<vmem>>, vector<27x32xf32>
    %cst = arith.constant dense<0.000000e+00> : vector<256x32xf32>
    %2 = tpu.matmul %0, %1, %cst {dimension_numbers = #tpu.dot_dimension_numbers<[1], [0], [0], [1], [0, 0, 1, 1], [], []>} : vector<256x27xf32>, vector<27x32xf32>, vector<256x32xf32> -> vector<256x32xf32>
    %c0_3 = arith.constant 0 : index
    %c0_4 = arith.constant 0 : index
    %3 = vector.load %arg3[%c0_3, %c0_4] : memref<1x32xf32, #tpu.memory_space<vmem>>, vector<1x32xf32>
    %4 = vector.broadcast %3 : vector<1x32xf32> to vector<256x32xf32>
    %5 = arith.addf %2, %4 : vector<256x32xf32>
    %cst_5 = arith.constant 0.000000e+00 : f32
    %6 = vector.broadcast %cst_5 : f32 to vector<256x32xf32>
    %7 = arith.maximumf %5, %6 : vector<256x32xf32>
    %8 = vector.shape_cast %7 : vector<256x32xf32> to vector<32x8x32xf32>
    %cst_6 = arith.constant dense<0xFF800000> : vector<32x32xf32>
    %9 = vector.multi_reduction <maximumf>, %8, %cst_6 [1] : vector<32x8x32xf32> to vector<32x32xf32>
    %c0_7 = arith.constant 0 : index
    %c0_8 = arith.constant 0 : index
    %10 = vector.load %arg4[%c0_7, %c0_8] : memref<32x32xf32, #tpu.memory_space<vmem>>, vector<32x32xf32>
    tpu.vector_store %arg4[%c0_7, %c0_8], %9 {strides = array<i32>} : memref<32x32xf32, #tpu.memory_space<vmem>>, vector<32x32xf32>,
    return
  }
  func.func @transform_0(%arg0: i32) -> (i32, i32) {
    %c0_i32 = arith.constant 0 : i32
    %c0_i32_0 = arith.constant 0 : i32
    return %arg0, %c0_i32 : i32, i32
  }
  func.func @transform_1(%arg0: i32) -> (i32, i32) {
    %c0_i32 = arith.constant 0 : i32
    %c0_i32_0 = arith.constant 0 : i32
    %c0_i32_1 = arith.constant 0 : i32
    return %c0_i32, %c0_i32_0 : i32, i32
  }
  func.func @transform_2(%arg0: i32) -> (i32, i32) {
    %c0_i32 = arith.constant 0 : i32
    %c0_i32_0 = arith.constant 0 : i32
    %c0_i32_1 = arith.constant 0 : i32
    return %c0_i32, %c0_i32_0 : i32, i32
  }
  func.func @transform_3(%arg0: i32) -> (i32, i32) {
    %c0_i32 = arith.constant 0 : i32
    %c0_i32_0 = arith.constant 0 : i32
    return %arg0, %c0_i32 : i32, i32
  }
}

module attributes {stable_mosaic.version = 11 : i64} {
  func.func @conv2_head_kernel(%arg0: i32, %arg1: memref<64x864xf32, #tpu.memory_space<vmem>>, %arg2: memref<864x64xf32, #tpu.memory_space<vmem>>, %arg3: memref<1x64xf32, #tpu.memory_space<vmem>>, %arg4: memref<256x32xf32, #tpu.memory_space<vmem>>, %arg5: memref<1x32xf32, #tpu.memory_space<vmem>>, %arg6: memref<1x32xf32, #tpu.memory_space<vmem>>, %arg7: memref<1xf32, #tpu.memory_space<smem>>, %arg8: memref<2x1xf32, #tpu.memory_space<vmem>>) attributes {dimension_semantics = [#tpu.dimension_semantics<parallel>], iteration_bounds = array<i64: 1>, scalar_prefetch = 0 : i64, scratch_operands = 0 : i64, tpu.core_type = #tpu.core_type<tc>, window_params = [{transform_indices = @transform_0, window_bounds = array<i64: 64, 864>}, {pipeline_mode = #tpu.pipeline_mode<synchronous>, transform_indices = @transform_1, window_bounds = array<i64: 864, 64>}, {pipeline_mode = #tpu.pipeline_mode<synchronous>, transform_indices = @transform_2, window_bounds = array<i64: 1, 64>}, {pipeline_mode = #tpu.pipeline_mode<synchronous>, transform_indices = @transform_3, window_bounds = array<i64: 256, 32>}, {pipeline_mode = #tpu.pipeline_mode<synchronous>, transform_indices = @transform_4, window_bounds = array<i64: 1, 32>}, {pipeline_mode = #tpu.pipeline_mode<synchronous>, transform_indices = @transform_5, window_bounds = array<i64: 1, 32>}, {transform_indices = @transform_6, window_bounds = array<i64: 1>}, {transform_indices = @transform_7, window_bounds = array<i64: 2, 1>}]} {
    %c0 = arith.constant 0 : index
    %c0_0 = arith.constant 0 : index
    %0 = vector.load %arg1[%c0, %c0_0] : memref<64x864xf32, #tpu.memory_space<vmem>>, vector<64x864xf32>
    %c0_1 = arith.constant 0 : index
    %c0_2 = arith.constant 0 : index
    %1 = vector.load %arg2[%c0_1, %c0_2] : memref<864x64xf32, #tpu.memory_space<vmem>>, vector<864x64xf32>
    %cst = arith.constant dense<0.000000e+00> : vector<64x64xf32>
    %2 = tpu.matmul %0, %1, %cst {dimension_numbers = #tpu.dot_dimension_numbers<[1], [0], [0], [1], [0, 0, 1, 1], [], []>} : vector<64x864xf32>, vector<864x64xf32>, vector<64x64xf32> -> vector<64x64xf32>
    %c0_3 = arith.constant 0 : index
    %c0_4 = arith.constant 0 : index
    %3 = vector.load %arg3[%c0_3, %c0_4] : memref<1x64xf32, #tpu.memory_space<vmem>>, vector<1x64xf32>
    %4 = vector.broadcast %3 : vector<1x64xf32> to vector<64x64xf32>
    %5 = arith.addf %2, %4 : vector<64x64xf32>
    %cst_5 = arith.constant 0.000000e+00 : f32
    %6 = vector.broadcast %cst_5 : f32 to vector<64x64xf32>
    %7 = arith.maximumf %5, %6 : vector<64x64xf32>
    %8 = vector.shape_cast %7 : vector<64x64xf32> to vector<2x4x8x64xf32>
    %cst_6 = arith.constant dense<0xFF800000> : vector<2x4x64xf32>
    %9 = vector.multi_reduction <maximumf>, %8, %cst_6 [2] : vector<2x4x8x64xf32> to vector<2x4x64xf32>
    %10 = vector.shape_cast %9 : vector<2x4x64xf32> to vector<2x256xf32>
    %c0_7 = arith.constant 0 : index
    %c0_8 = arith.constant 0 : index
    %11 = vector.load %arg4[%c0_7, %c0_8] : memref<256x32xf32, #tpu.memory_space<vmem>>, vector<256x32xf32>
    %cst_9 = arith.constant dense<0.000000e+00> : vector<2x32xf32>
    %12 = tpu.matmul %10, %11, %cst_9 {dimension_numbers = #tpu.dot_dimension_numbers<[1], [0], [0], [1], [0, 0, 1, 1], [], []>} : vector<2x256xf32>, vector<256x32xf32>, vector<2x32xf32> -> vector<2x32xf32>
    %c0_10 = arith.constant 0 : index
    %c0_11 = arith.constant 0 : index
    %13 = vector.load %arg5[%c0_10, %c0_11] : memref<1x32xf32, #tpu.memory_space<vmem>>, vector<1x32xf32>
    %14 = vector.broadcast %13 : vector<1x32xf32> to vector<2x32xf32>
    %15 = arith.addf %12, %14 : vector<2x32xf32>
    %cst_12 = arith.constant 0.000000e+00 : f32
    %16 = vector.broadcast %cst_12 : f32 to vector<2x32xf32>
    %17 = arith.maximumf %15, %16 : vector<2x32xf32>
    %c0_13 = arith.constant 0 : index
    %c0_14 = arith.constant 0 : index
    %18 = vector.load %arg6[%c0_13, %c0_14] : memref<1x32xf32, #tpu.memory_space<vmem>>, vector<1x32xf32>
    %19 = vector.broadcast %18 : vector<1x32xf32> to vector<2x32xf32>
    %20 = arith.mulf %17, %19 : vector<2x32xf32>
    %cst_15 = arith.constant dense<0.000000e+00> : vector<2xf32>
    %21 = vector.multi_reduction <add>, %20, %cst_15 [1] : vector<2x32xf32> to vector<2xf32>
    %22 = vector.shape_cast %21 : vector<2xf32> to vector<2x1xf32>
    %c0_16 = arith.constant 0 : index
    %23 = memref.load %arg7[%c0_16] : memref<1xf32, #tpu.memory_space<smem>>
    %24 = vector.broadcast %23 : f32 to vector<2x1xf32>
    %25 = arith.addf %22, %24 : vector<2x1xf32>
    %c0_17 = arith.constant 0 : index
    %c0_18 = arith.constant 0 : index
    %26 = vector.load %arg8[%c0_17, %c0_18] : memref<2x1xf32, #tpu.memory_space<vmem>>, vector<2x1xf32>
    tpu.vector_store %arg8[%c0_17, %c0_18], %25 {strides = array<i32>} : memref<2x1xf32, #tpu.memory_space<vmem>>, vector<2x1xf32>,
    return
  }
  func.func @transform_0(%arg0: i32) -> (i32, i32) {
    %c0_i32 = arith.constant 0 : i32
    %c0_i32_0 = arith.constant 0 : i32
    return %arg0, %c0_i32 : i32, i32
  }
  func.func @transform_1(%arg0: i32) -> (i32, i32) {
    %c0_i32 = arith.constant 0 : i32
    %c0_i32_0 = arith.constant 0 : i32
    %c0_i32_1 = arith.constant 0 : i32
    return %c0_i32, %c0_i32_0 : i32, i32
  }
  func.func @transform_2(%arg0: i32) -> (i32, i32) {
    %c0_i32 = arith.constant 0 : i32
    %c0_i32_0 = arith.constant 0 : i32
    %c0_i32_1 = arith.constant 0 : i32
    return %c0_i32, %c0_i32_0 : i32, i32
  }
  func.func @transform_3(%arg0: i32) -> (i32, i32) {
    %c0_i32 = arith.constant 0 : i32
    %c0_i32_0 = arith.constant 0 : i32
    %c0_i32_1 = arith.constant 0 : i32
    return %c0_i32, %c0_i32_0 : i32, i32
  }
  func.func @transform_4(%arg0: i32) -> (i32, i32) {
    %c0_i32 = arith.constant 0 : i32
    %c0_i32_0 = arith.constant 0 : i32
    %c0_i32_1 = arith.constant 0 : i32
    return %c0_i32, %c0_i32_0 : i32, i32
  }
  func.func @transform_5(%arg0: i32) -> (i32, i32) {
    %c0_i32 = arith.constant 0 : i32
    %c0_i32_0 = arith.constant 0 : i32
    %c0_i32_1 = arith.constant 0 : i32
    return %c0_i32, %c0_i32_0 : i32, i32
  }
  func.func @transform_6(%arg0: i32) -> i32 {
    %c0_i32 = arith.constant 0 : i32
    %c0_i32_0 = arith.constant 0 : i32
    return %c0_i32 : i32
  }
  func.func @transform_7(%arg0: i32) -> (i32, i32) {
    %c0_i32 = arith.constant 0 : i32
    %c0_i32_0 = arith.constant 0 : i32
    return %arg0, %c0_i32 : i32, i32
  }
}

</mosaic_0001>

<llo_original>
// kernel: net4_forward.2
$region0: #{net4_forward.2}
  #allocation0 [shape = 'u32[]', space=smem, size = 0x4, offset = 0x4, fixed_abs, tag = 'smem constant byte address 0x4 - core index']
  #allocation1 [shape = 'u32[144,128]{1,0:T(1,128)}', space=vmem, size = 0x12000, scoped, tag = 'internal scratch']
  %s0 = inlined_call_operand.vmem [shape: f32[512,27], index: 0, kind: input, shape index: {}]
  %s1 = inlined_call_operand.vmem [shape: f32[27,32], index: 1, kind: input, shape index: {}]
  %s2 = inlined_call_operand.vmem [shape: f32[1,32], index: 2, kind: input, shape index: {}]
  %s3 = inlined_call_operand.vmem [shape: f32[64,32], index: 3, kind: output, shape index: {}]
  %s4 = sld [smem:[#allocation0]]
  $region45: #{net4_forward.2} parent=0
    _
  %s6 = ssub.s32 1, %s4
  %s7 = scalar_select 0, %s6, %s4
  loop: start=0, step=1, limit=4
  $region2: #{net4_forward.2} parent=0 // loop_pre_header
    _
  $region3: #{net4_forward.2} parent=0 // loop_header
    %s9 = sphi 0, %s13
    %p10 = scmp.ge.s32.totalorder %s9, 4
    %s19 = sphi 0, %s21
    %s22 = sphi 0, %s19
    %s23 = sphi 0, %s22
    %s39 = sphi 0, %s23
    %s43 = sphi 0, %s43
    %s45 = sphi 0, %s43
    %s46 = sphi 0, %s45
    %s60 = sphi 0, %s46
    %s64 = sphi 0, %s64
    %s66 = sphi 0, %s64
    %s67 = sphi 0, %s66
    %s81 = sphi 0, %s67
    %s87 = sphi 0, %s89
    %s90 = sphi 0, %s87
    %s91 = sphi 0, %s90
    %s107 = sphi 0, %s91
  $region4: #{net4_forward.2} parent=0 // loop_header_branch
    %12 = sbr.rel (%p10) target = $region8
  $region5: #{net4_forward.2} parent=0 // loop_body
    %s14 = ssub.s32 %s9, 1
    %s15 = ssub.s32 %s9, 2
    %s16 = sadd.s32 %s9, 1
    %s17 = ssub.s32 %s9, %s16
    %p18 = scmp.eq.s32.totalorder %s17, 0
    %s20 = sadd.s32 %s19, 1
    %s21 = scalar_select %p18, %s19, %s20
    %p24 = pneg %p18
    %p25 = scmp.eq.s32.totalorder %s9, 1
    %p26 = por %p24, %p25
    %p27 = scmp.ne.s32.totalorder %s19, %s22
    %p28 = scmp.eq.s32.totalorder %s9, 0
    %p29 = por %p27, %p28
    %p30 = scmp.ne.s32.totalorder %s19, %s22
    %p31 = scmp.eq.s32.totalorder %s14, 1
    %p32 = por %p30, %p31
    %p33 = scmp.ne.s32.totalorder %s22, %s23
    %p34 = scmp.eq.s32.totalorder %s14, 0
    %p35 = por %p33, %p34
    %p36 = scmp.ne.s32.totalorder %s22, %s23
    %p37 = scmp.eq.s32.totalorder %s15, 1
    %p38 = por %p36, %p37
    %p40 = scmp.ne.s32.totalorder %s23, %s39
    %p41 = scmp.eq.s32.totalorder %s15, 0
    %p42 = por %p40, %p41
    %s44 = sadd.s32 %s43, 1
    %p47 = scmp.eq.s32.totalorder %s9, 1
    %p48 = scmp.ne.s32.totalorder %s43, %s45
    %p49 = scmp.eq.s32.totalorder %s9, 0
    %p50 = por %p48, %p49
    %p51 = scmp.ne.s32.totalorder %s43, %s45
    %p52 = scmp.eq.s32.totalorder %s14, 1
    %p53 = por %p51, %p52
    %p54 = scmp.ne.s32.totalorder %s45, %s46
    %p55 = scmp.eq.s32.totalorder %s14, 0
    %p56 = por %p54, %p55
    %p57 = scmp.ne.s32.totalorder %s45, %s46
    %p58 = scmp.eq.s32.totalorder %s15, 1
    %p59 = por %p57, %p58
    %p61 = scmp.ne.s32.totalorder %s46, %s60
    %p62 = scmp.eq.s32.totalorder %s15, 0
    %p63 = por %p61, %p62
    %s65 = sadd.s32 %s64, 1
    %p68 = scmp.eq.s32.totalorder %s9, 1
    %p69 = scmp.ne.s32.totalorder %s64, %s66
    %p70 = scmp.eq.s32.totalorder %s9, 0
    %p71 = por %p69, %p70
    %p72 = scmp.ne.s32.totalorder %s64, %s66
    %p73 = scmp.eq.s32.totalorder %s14, 1
    %p74 = por %p72, %p73
    %p75 = scmp.ne.s32.totalorder %s66, %s67
    %p76 = scmp.eq.s32.totalorder %s14, 0
    %p77 = por %p75, %p76
    %p78 = scmp.ne.s32.totalorder %s66, %s67
    %p79 = scmp.eq.s32.totalorder %s15, 1
    %p80 = por %p78, %p79
    %p82 = scmp.ne.s32.totalorder %s67, %s81
    %p83 = scmp.eq.s32.totalorder %s15, 0
    %p84 = por %p82, %p83
    %s85 = ssub.s32 %s9, %s16
    %p86 = scmp.eq.s32.totalorder %s85, 0
    %s88 = sadd.s32 %s87, 1
    %s89 = scalar_select %p86, %s87, %s88
    %p92 = pneg %p86
    %p93 = scmp.eq.s32.totalorder %s9, 1
    %p94 = por %p92, %p93
    %p95 = scmp.ne.s32.totalorder %s87, %s90
    %p96 = scmp.eq.s32.totalorder %s9, 0
    %p97 = por %p95, %p96
    %p98 = scmp.ne.s32.totalorder %s87, %s90
    %p99 = scmp.eq.s32.totalorder %s14, 1
    %p100 = por %p98, %p99
    %p101 = scmp.ne.s32.totalorder %s90, %s91
    %p102 = scmp.eq.s32.totalorder %s14, 0
    %p103 = por %p101, %p102
    %p104 = scmp.ne.s32.totalorder %s90, %s91
    %p105 = scmp.eq.s32.totalorder %s15, 1
    %p106 = por %p104, %p105
    %p108 = scmp.ne.s32.totalorder %s91, %s107
    %p109 = scmp.eq.s32.totalorder %s15, 0
    %p110 = por %p108, %p109
    %p111 = scmp.le.s32.totalorder 1, %s9
    %p112 = scmp.lt.s32.totalorder %s9, 3
    %p113 = pnand %p111, %p112
    %p114 = pneg %p113
    // Predicated region
    $region9: #{net4_forward.2} parent=5 // pred_check
      _
    $region10: #{net4_forward.2} parent=5 // pred_check_branch
      %116 = sbr.rel (%p113) target = $region12
    $region11: #{net4_forward.2} parent=5 // pred_region
      %s117 = ssub.s32 %s9, 1
      // Predicated region
      $region13: #{net4_forward.2} parent=11 // pred_check
        %p118 = pneg %p56
      $region14: #{net4_forward.2} parent=11 // pred_check_branch
        %120 = sbr.rel (%p118) target = $region16
      $region15: #{net4_forward.2} parent=11 // pred_region
        _
      $region16: #{net4_forward.2} parent=11 // pred_fallthru
        _
      // Predicated region
      $region17: #{net4_forward.2} parent=11 // pred_check
        %p121 = pneg %p77
      $region18: #{net4_forward.2} parent=11 // pred_check_branch
        %123 = sbr.rel (%p121) target = $region20
      $region19: #{net4_forward.2} parent=11 // pred_region
        _
      $region20: #{net4_forward.2} parent=11 // pred_fallthru
        _
    $region12: #{net4_forward.2} parent=5 // pred_fallthru
      _
    %p124 = scmp.lt.s32.totalorder %s9, 2
    // Predicated region
    $region21: #{net4_forward.2} parent=5 // pred_check
      %p125 = pneg %p124
    $region22: #{net4_forward.2} parent=5 // pred_check_branch
      %127 = sbr.rel (%p125) target = $region24
    $region23: #{net4_forward.2} parent=5 // pred_region
      // Predicated region
      $region25: #{net4_forward.2} parent=23 // pred_check
        %p128 = pneg %p29
      $region26: #{net4_forward.2} parent=23 // pred_check_branch
        %130 = sbr.rel (%p128) target = $region28
      $region27: #{net4_forward.2} parent=23 // pred_region
        %s131 = smul.u32 32, %s9
        %p132 = scmp.lt.s32.totalorder %s131, 63
        %s133 = scalar_select %p132, %s131, 63
        %s134 = smul.addr %s133, 8
        %s135 = scalar_lea.vmem %s0, %s134
        %s136 = smul.u32 32, %s9
      $region28: #{net4_forward.2} parent=23 // pred_fallthru
        _
    $region24: #{net4_forward.2} parent=5 // pred_fallthru
      _
    %p137 = scmp.le.s32.totalorder 1, %s9
    %p138 = scmp.lt.s32.totalorder %s9, 3
    %p139 = pnand %p137, %p138
    %p140 = pneg %p139
    // Predicated region
    $region29: #{net4_forward.2} parent=5 // pred_check
      _
    $region30: #{net4_forward.2} parent=5 // pred_check_branch
      %142 = sbr.rel (%p139) target = $region32
    $region31: #{net4_forward.2} parent=5 // pred_region
      %s143 = ssub.s32 %s9, 1
      %s144 = smul.u32 32, %s14
      %p145 = scmp.lt.s32.totalorder %s144, 63
      %s146 = scalar_select %p145, %s144, 63
      %s147 = smul.addr %s146, 8
      %s148 = scalar_lea.vmem %s0, %s147
      %p149 = pneg %p35
      %p150 = pneg %p32
      %p151 = pneg %p56
      %p152 = pneg %p53
      %p153 = pneg %p77
      %p154 = pneg %p74
      %p155 = pneg %p103
      %p156 = pneg %p100
      %s157 = smul.u32 4, %s14
      %p158 = scmp.lt.s32.totalorder %s157, 7
      %s159 = scalar_select %p158, %s157, 7
      %s160 = smul.addr %s159, 8
      %s161 = scalar_lea.vmem %s3, %s160
      %s162 = smul.u32 32, %s14
      %p163 = scmp.lt.s32.totalorder %s162, 63
      %s164 = scalar_select %p163, %s162, 63
      %s165 = smul.addr %s164, 8
      %s166 = scalar_lea.vmem %s0, %s165
      %s167 = smul.u32 32, %s14
      %s168 = smul.u32 4, %s14
      %p169 = scmp.lt.s32.totalorder %s168, 7
      %s170 = scalar_select %p169, %s168, 7
      %s171 = smul.addr %s170, 8
      %s172 = scalar_lea.vmem %s3, %s171
      %s173 = smul.u32 4, %s14
      %v174 = vld [vmem:[%s166] sm:$0xff]
      %v175 = vld [vmem:[%s166 + $0x8] sm:$0xff]
      %v176 = vld [vmem:[%s166 + $0x10] sm:$0xff]
      %v177 = vld [vmem:[%s166 + $0x18] sm:$0xff]
      %v178 = vld [vmem:[%s166 + $0x20] sm:$0xff]
      %v179 = vld [vmem:[%s166 + $0x28] sm:$0xff]
      %v180 = vld [vmem:[%s166 + $0x30] sm:$0xff]
      %v181 = vld [vmem:[%s166 + $0x38] sm:$0xff]
      %v182 = vld [vmem:[%s166 + $0x40] sm:$0xff]
      %v183 = vld [vmem:[%s166 + $0x48] sm:$0xff]
      %v184 = vld [vmem:[%s166 + $0x50] sm:$0xff]
      %v185 = vld [vmem:[%s166 + $0x58] sm:$0xff]
      %v186 = vld [vmem:[%s166 + $0x60] sm:$0xff]
      %v187 = vld [vmem:[%s166 + $0x68] sm:$0xff]
      %v188 = vld [vmem:[%s166 + $0x70] sm:$0xff]
      %v189 = vld [vmem:[%s166 + $0x78] sm:$0xff]
      %v190 = vld [vmem:[%s166 + $0x80] sm:$0xff]
      %v191 = vld [vmem:[%s166 + $0x88] sm:$0xff]
      %v192 = vld [vmem:[%s166 + $0x90] sm:$0xff]
      %v193 = vld [vmem:[%s166 + $0x98] sm:$0xff]
      %v194 = vld [vmem:[%s166 + $0xa0] sm:$0xff]
      %v195 = vld [vmem:[%s166 + $0xa8] sm:$0xff]
      %v196 = vld [vmem:[%s166 + $0xb0] sm:$0xff]
      %v197 = vld [vmem:[%s166 + $0xb8] sm:$0xff]
      %v198 = vld [vmem:[%s166 + $0xc0] sm:$0xff]
      %v199 = vld [vmem:[%s166 + $0xc8] sm:$0xff]
      %v200 = vld [vmem:[%s166 + $0xd0] sm:$0xff]
      %v201 = vld [vmem:[%s166 + $0xd8] sm:$0xff]
      %v202 = vld [vmem:[%s166 + $0xe0] sm:$0xff]
      %v203 = vld [vmem:[%s166 + $0xe8] sm:$0xff]
      %v204 = vld [vmem:[%s166 + $0xf0] sm:$0xff]
      %v205 = vld [vmem:[%s166 + $0xf8] sm:$0xff]
      %v206 = vld [vmem:[%s1] sm:$0xff]
      %v207 = vld [vmem:[%s1 + $0x8] sm:$0xff]
      %v208 = vld [vmem:[%s1 + $0x10] sm:$0xff]
      %v209 = vld [vmem:[%s1 + $0x18] sm:$0x7]
      %v210 = vld [vmem:[%s2] sm:$0x1]
      %v212 = vlaneseq
      %v213 = vshrl.u32 %v212, 7
      %v214 = vsub.s32 0, %v213
      %v215 = vrot.slane %v210, %v214
      %vm217 = vcmask 220160
      %v219 = vsel %vm217, %v174, 0
      %v222 = vsel %vm217, %v175, 0
      %v225 = vsel %vm217, %v176, 0
      %v228 = vsel %vm217, %v177, 0
      %v231 = vsel %vm217, %v178, 0
      %v234 = vsel %vm217, %v179, 0
      %v237 = vsel %vm217, %v180, 0
      %v240 = vsel %vm217, %v181, 0
      %v243 = vsel %vm217, %v182, 0
      %v246 = vsel %vm217, %v183, 0
      %v249 = vsel %vm217, %v184, 0
      %v252 = vsel %vm217, %v185, 0
      %v255 = vsel %vm217, %v186, 0
      %v258 = vsel %vm217, %v187, 0
      %v261 = vsel %vm217, %v188, 0
      %v264 = vsel %vm217, %v189, 0
      %v267 = vsel %vm217, %v190, 0
      %v270 = vsel %vm217, %v191, 0
      %v273 = vsel %vm217, %v192, 0
      %v276 = vsel %vm217, %v193, 0
      %v279 = vsel %vm217, %v194, 0
      %v282 = vsel %vm217, %v195, 0
      %v285 = vsel %vm217, %v196, 0
      %v288 = vsel %vm217, %v197, 0
      %v291 = vsel %vm217, %v198, 0
      %v294 = vsel %vm217, %v199, 0
      %v297 = vsel %vm217, %v200, 0
      %v300 = vsel %vm217, %v201, 0
      %v303 = vsel %vm217, %v202, 0
      %v306 = vsel %vm217, %v203, 0
      %v309 = vsel %vm217, %v204, 0
      %v312 = vsel %vm217, %v205, 0
      %vm314 = vcmask 1042432
      %v316 = vsel %vm314, %v209, 0
      %318 = vmatprep.subr.mxu0 0.0
      %319 = vmatpush1.msra.mxu0 %v206
      %320 = vmatprep.subr.mxu0 0.0
      %321 = vmatpush1.msra.mxu0 %v207
      %322 = vmatprep.subr.mxu0 0.0
      %323 = vmatpush1.msra.mxu0 %v208
      %324 = vmatprep.subr.mxu0 0.0
      %325 = vmatpush1.msra.mxu0 %v316
      %326 = vmatprep.subr.mxu0 0.0
      %327 = vmatpush1.msra.mxu0 0.0
      %328 = vmatprep.subr.mxu0 0.0
      %329 = vmatpush1.msra.mxu0 0.0
      %330 = vmatprep.subr.mxu0 0.0
      %331 = vmatpush1.msra.mxu0 0.0
      %332 = vmatprep.subr.mxu0 0.0
      %333 = vmatpush1.msra.mxu0 0.0
      %334 = vmatprep.subr.mxu0 0.0
      %335 = vmatpush1.msra.mxu0 0.0
      %336 = vmatprep.subr.mxu0 0.0
      %337 = vmatpush1.msra.mxu0 0.0
      %338 = vmatprep.subr.mxu0 0.0
      %339 = vmatpush1.msra.mxu0 0.0
      %340 = vmatprep.subr.mxu0 0.0
      %341 = vmatpush1.msra.mxu0 0.0
      %342 = vmatprep.subr.mxu0 0.0
      %343 = vmatpush1.msra.mxu0 0.0
      %344 = vmatprep.subr.mxu0 0.0
      %345 = vmatpush1.msra.mxu0 0.0
      %346 = vmatprep.subr.mxu0 0.0
      %347 = vmatpush1.msra.mxu0 0.0
      %348 = vmatprep.subr.mxu0 0.0
      %349 = vmatpush1.msra.mxu0 0.0
      %350 = vmatprep.subr.mxu0 0.0
      %351 = vmatpush1.msra.mxu0 0.0
      %352 = vmatprep.subr.mxu0 0.0
      %353 = vmatpush1.msra.mxu0 0.0
      %354 = vmatprep.subr.mxu0 0.0
      %355 = vmatpush1.msra.mxu0 0.0
      %356 = vmatprep.subr.mxu0 0.0
      %357 = vmatpush1.msra.mxu0 0.0
      %358 = vmatprep.subr.mxu0 0.0
      %359 = vmatpush1.msra.mxu0 0.0
      %360 = vmatprep.subr.mxu0 0.0
      %361 = vmatpush1.msra.mxu0 0.0
      %362 = vmatprep.subr.mxu0 0.0
      %363 = vmatpush1.msra.mxu0 0.0
      %364 = vmatprep.subr.mxu0 0.0
      %365 = vmatpush1.msra.mxu0 0.0
      %366 = vmatprep.subr.mxu0 0.0
      %367 = vmatpush1.msra.mxu0 0.0
      %368 = vmatprep.subr.mxu0 0.0
      %369 = vmatpush1.msra.mxu0 0.0
      %370 = vmatprep.subr.mxu0 0.0
      %371 = vmatpush1.msra.mxu0 0.0
      %372 = vmatprep.subr.mxu0 0.0
      %373 = vmatpush1.msra.mxu0 0.0
      %374 = vmatprep.subr.mxu0 0.0
      %375 = vmatpush1.msra.mxu0 0.0
      %376 = vmatprep.subr.mxu0 0.0
      %377 = vmatpush1.msra.mxu0 0.0
      %378 = vmatprep.subr.mxu0 0.0
      %379 = vmatpush1.msra.mxu0 0.0
      %380 = vmatprep.subr.mxu0 0.0
      %381 = vmatpush1.msra.mxu0 0.0
      %382 = vmatprep.mubr.f32.mxu0 0.0
      %383 = vmatmul.mubr.f32.gmra.mrb[0].mxu0 %v219
      %v384 = vpop.f32.mrb[0].mxu0
      %v385 = vadd.f32 %v215, %v384
      %v386 = vpop.f32.mrb[0].mxu0
      %387 = vmatprep.mubr.f32.mxu0 0.0
      %388 = vmatmul.mubr.f32.gmra.mrb[0].mxu0 %v222
      %v389 = vpop.f32.mrb[0].mxu0
      %v390 = vadd.f32 %v215, %v389
      %v391 = vpop.f32.mrb[0].mxu0
      %392 = vmatprep.mubr.f32.mxu0 0.0
      %393 = vmatmul.mubr.f32.gmra.mrb[0].mxu0 %v225
      %v394 = vpop.f32.mrb[0].mxu0
      %v395 = vadd.f32 %v215, %v394
      %v396 = vpop.f32.mrb[0].mxu0
      %397 = vmatprep.mubr.f32.mxu0 0.0
      %398 = vmatmul.mubr.f32.gmra.mrb[0].mxu0 %v228
      %v399 = vpop.f32.mrb[0].mxu0
      %v400 = vadd.f32 %v215, %v399
      %v401 = vpop.f32.mrb[0].mxu0
      %402 = vmatprep.mubr.f32.mxu0 0.0
      %403 = vmatmul.mubr.f32.gmra.mrb[0].mxu0 %v231
      %v404 = vpop.f32.mrb[0].mxu0
      %v405 = vadd.f32 %v215, %v404
      %v406 = vpop.f32.mrb[0].mxu0
      %407 = vmatprep.mubr.f32.mxu0 0.0
      %408 = vmatmul.mubr.f32.gmra.mrb[0].mxu0 %v234
      %v409 = vpop.f32.mrb[0].mxu0
      %v410 = vadd.f32 %v215, %v409
      %v411 = vpop.f32.mrb[0].mxu0
      %412 = vmatprep.mubr.f32.mxu0 0.0
      %413 = vmatmul.mubr.f32.gmra.mrb[0].mxu0 %v237
      %v414 = vpop.f32.mrb[0].mxu0
      %v415 = vadd.f32 %v215, %v414
      %v416 = vpop.f32.mrb[0].mxu0
      %417 = vmatprep.mubr.f32.mxu0 0.0
      %418 = vmatmul.mubr.f32.gmra.mrb[0].mxu0 %v240
      %v419 = vpop.f32.mrb[0].mxu0
      %v420 = vadd.f32 %v215, %v419
      %v421 = vpop.f32.mrb[0].mxu0
      %422 = vmatprep.mubr.f32.mxu0 0.0
      %423 = vmatmul.mubr.f32.gmra.mrb[0].mxu0 %v243
      %v424 = vpop.f32.mrb[0].mxu0
      %v425 = vadd.f32 %v215, %v424
      %v426 = vpop.f32.mrb[0].mxu0
      %427 = vmatprep.mubr.f32.mxu0 0.0
      %428 = vmatmul.mubr.f32.gmra.mrb[0].mxu0 %v246
      %v429 = vpop.f32.mrb[0].mxu0
      %v430 = vadd.f32 %v215, %v429
      %v431 = vpop.f32.mrb[0].mxu0
      %432 = vmatprep.mubr.f32.mxu0 0.0
      %433 = vmatmul.mubr.f32.gmra.mrb[0].mxu0 %v249
      %v434 = vpop.f32.mrb[0].mxu0
      %v435 = vadd.f32 %v215, %v434
      %v436 = vpop.f32.mrb[0].mxu0
      %437 = vmatprep.mubr.f32.mxu0 0.0
      %438 = vmatmul.mubr.f32.gmra.mrb[0].mxu0 %v252
      %v439 = vpop.f32.mrb[0].mxu0
      %v440 = vadd.f32 %v215, %v439
      %v441 = vpop.f32.mrb[0].mxu0
      %442 = vmatprep.mubr.f32.mxu0 0.0
      %443 = vmatmul.mubr.f32.gmra.mrb[0].mxu0 %v255
      %v444 = vpop.f32.mrb[0].mxu0
      %v445 = vadd.f32 %v215, %v444
      %v446 = vpop.f32.mrb[0].mxu0
      %447 = vmatprep.mubr.f32.mxu0 0.0
      %448 = vmatmul.mubr.f32.gmra.mrb[0].mxu0 %v258
      %v449 = vpop.f32.mrb[0].mxu0
      %v450 = vadd.f32 %v215, %v449
      %v451 = vpop.f32.mrb[0].mxu0
      %452 = vmatprep.mubr.f32.mxu0 0.0
      %453 = vmatmul.mubr.f32.gmra.mrb[0].mxu0 %v261
      %v454 = vpop.f32.mrb[0].mxu0
      %v455 = vadd.f32 %v215, %v454
      %v456 = vpop.f32.mrb[0].mxu0
      %457 = vmatprep.mubr.f32.mxu0 0.0
      %458 = vmatmul.mubr.f32.gmra.mrb[0].mxu0 %v264
      %v459 = vpop.f32.mrb[0].mxu0
      %v460 = vadd.f32 %v215, %v459
      %v461 = vpop.f32.mrb[0].mxu0
      %462 = vmatprep.mubr.f32.mxu0 0.0
      %463 = vmatmul.mubr.f32.gmra.mrb[0].mxu0 %v267
      %v464 = vpop.f32.mrb[0].mxu0
      %v465 = vadd.f32 %v215, %v464
      %v466 = vpop.f32.mrb[0].mxu0
      %467 = vmatprep.mubr.f32.mxu0 0.0
      %468 = vmatmul.mubr.f32.gmra.mrb[0].mxu0 %v270
      %v469 = vpop.f32.mrb[0].mxu0
      %v470 = vadd.f32 %v215, %v469
      %v471 = vpop.f32.mrb[0].mxu0
      %472 = vmatprep.mubr.f32.mxu0 0.0
      %473 = vmatmul.mubr.f32.gmra.mrb[0].mxu0 %v273
      %v474 = vpop.f32.mrb[0].mxu0
      %v475 = vadd.f32 %v215, %v474
      %v476 = vpop.f32.mrb[0].mxu0
      %477 = vmatprep.mubr.f32.mxu0 0.0
      %478 = vmatmul.mubr.f32.gmra.mrb[0].mxu0 %v276
      %v479 = vpop.f32.mrb[0].mxu0
      %v480 = vadd.f32 %v215, %v479
      %v481 = vpop.f32.mrb[0].mxu0
      %482 = vmatprep.mubr.f32.mxu0 0.0
      %483 = vmatmul.mubr.f32.gmra.mrb[0].mxu0 %v279
      %v484 = vpop.f32.mrb[0].mxu0
      %v485 = vadd.f32 %v215, %v484
      %v486 = vpop.f32.mrb[0].mxu0
      %487 = vmatprep.mubr.f32.mxu0 0.0
      %488 = vmatmul.mubr.f32.gmra.mrb[0].mxu0 %v282
      %v489 = vpop.f32.mrb[0].mxu0
      %v490 = vadd.f32 %v215, %v489
      %v491 = vpop.f32.mrb[0].mxu0
      %492 = vmatprep.mubr.f32.mxu0 0.0
      %493 = vmatmul.mubr.f32.gmra.mrb[0].mxu0 %v285
      %v494 = vpop.f32.mrb[0].mxu0
      %v495 = vadd.f32 %v215, %v494
      %v496 = vpop.f32.mrb[0].mxu0
      %497 = vmatprep.mubr.f32.mxu0 0.0
      %498 = vmatmul.mubr.f32.gmra.mrb[0].mxu0 %v288
      %v499 = vpop.f32.mrb[0].mxu0
      %v500 = vadd.f32 %v215, %v499
      %v501 = vpop.f32.mrb[0].mxu0
      %502 = vmatprep.mubr.f32.mxu0 0.0
      %503 = vmatmul.mubr.f32.gmra.mrb[0].mxu0 %v291
      %v504 = vpop.f32.mrb[0].mxu0
      %v505 = vadd.f32 %v215, %v504
      %v506 = vpop.f32.mrb[0].mxu0
      %507 = vmatprep.mubr.f32.mxu0 0.0
      %508 = vmatmul.mubr.f32.gmra.mrb[0].mxu0 %v294
      %v509 = vpop.f32.mrb[0].mxu0
      %v510 = vadd.f32 %v215, %v509
      %v511 = vpop.f32.mrb[0].mxu0
      %512 = vmatprep.mubr.f32.mxu0 0.0
      %513 = vmatmul.mubr.f32.gmra.mrb[0].mxu0 %v297
      %v514 = vpop.f32.mrb[0].mxu0
      %v515 = vadd.f32 %v215, %v514
      %v516 = vpop.f32.mrb[0].mxu0
      %517 = vmatprep.mubr.f32.mxu0 0.0
      %518 = vmatmul.mubr.f32.gmra.mrb[0].mxu0 %v300
      %v519 = vpop.f32.mrb[0].mxu0
      %v520 = vadd.f32 %v215, %v519
      %v521 = vpop.f32.mrb[0].mxu0
      %522 = vmatprep.mubr.f32.mxu0 0.0
      %523 = vmatmul.mubr.f32.gmra.mrb[0].mxu0 %v303
      %v524 = vpop.f32.mrb[0].mxu0
      %v525 = vadd.f32 %v215, %v524
      %v526 = vpop.f32.mrb[0].mxu0
      %527 = vmatprep.mubr.f32.mxu0 0.0
      %528 = vmatmul.mubr.f32.gmra.mrb[0].mxu0 %v306
      %v529 = vpop.f32.mrb[0].mxu0
      %v530 = vadd.f32 %v215, %v529
      %v531 = vpop.f32.mrb[0].mxu0
      %532 = vmatprep.mubr.f32.mxu0 0.0
      %533 = vmatmul.mubr.f32.gmra.mrb[0].mxu0 %v309
      %v534 = vpop.f32.mrb[0].mxu0
      %v535 = vadd.f32 %v215, %v534
      %v536 = vpop.f32.mrb[0].mxu0
      %537 = vmatprep.mubr.f32.mxu0 0.0
      %538 = vmatmul.mubr.f32.gmra.mrb[0].mxu0 %v312
      %v539 = vpop.f32.mrb[0].mxu0
      %v540 = vadd.f32 %v215, %v539
      %v541 = vpop.f32.mrb[0].mxu0
      %542 = vdwg.mxu0
      %v543 = vmax.f32 %v385, 0.0
      %v544 = vmax.f32 %v390, 0.0
      %v545 = vmax.f32 %v395, 0.0
      %v546 = vmax.f32 %v400, 0.0
      %v547 = vmax.f32 %v405, 0.0
      %v548 = vmax.f32 %v410, 0.0
      %v549 = vmax.f32 %v415, 0.0
      %v550 = vmax.f32 %v420, 0.0
      %v551 = vmax.f32 %v425, 0.0
      %v552 = vmax.f32 %v430, 0.0
      %v553 = vmax.f32 %v435, 0.0
      %v554 = vmax.f32 %v440, 0.0
      %v555 = vmax.f32 %v445, 0.0
      %v556 = vmax.f32 %v450, 0.0
      %v557 = vmax.f32 %v455, 0.0
      %v558 = vmax.f32 %v460, 0.0
      %v559 = vmax.f32 %v465, 0.0
      %v560 = vmax.f32 %v470, 0.0
      %v561 = vmax.f32 %v475, 0.0
      %v562 = vmax.f32 %v480, 0.0
      %v563 = vmax.f32 %v485, 0.0
      %v564 = vmax.f32 %v490, 0.0
      %v565 = vmax.f32 %v495, 0.0
      %v566 = vmax.f32 %v500, 0.0
      %v567 = vmax.f32 %v505, 0.0
      %v568 = vmax.f32 %v510, 0.0
      %v569 = vmax.f32 %v515, 0.0
      %v570 = vmax.f32 %v520, 0.0
      %v571 = vmax.f32 %v525, 0.0
      %v572 = vmax.f32 %v530, 0.0
      %v573 = vmax.f32 %v535, 0.0
      %v574 = vmax.f32 %v540, 0.0
      %vm575 = vcmask 261120
      %v576 = vsel %vm575, %v543, -inf
      %v577 = vrot.slane %v576, 4
      %v578 = vmax.f32 %v576, %v577
      %v579 = vrot.slane %v578, 2
      %v580 = vmax.f32 %v578, %v579
      %v581 = vrot.slane %v580, 1
      %v582 = vmax.f32 %v580, %v581
      %v583 = vsel %vm575, %v544, -inf
      %v584 = vrot.slane %v583, 4
      %v585 = vmax.f32 %v583, %v584
      %v586 = vrot.slane %v585, 2
      %v587 = vmax.f32 %v585, %v586
      %v588 = vrot.slane %v587, 1
      %v589 = vmax.f32 %v587, %v588
      %v590 = vsel %vm575, %v545, -inf
      %v591 = vrot.slane %v590, 4
      %v592 = vmax.f32 %v590, %v591
      %v593 = vrot.slane %v592, 2
      %v594 = vmax.f32 %v592, %v593
      %v595 = vrot.slane %v594, 1
      %v596 = vmax.f32 %v594, %v595
      %v597 = vsel %vm575, %v546, -inf
      %v598 = vrot.slane %v597, 4
      %v599 = vmax.f32 %v597, %v598
      %v600 = vrot.slane %v599, 2
      %v601 = vmax.f32 %v599, %v600
      %v602 = vrot.slane %v601, 1
      %v603 = vmax.f32 %v601, %v602
      %v604 = vsel %vm575, %v547, -inf
      %v605 = vrot.slane %v604, 4
      %v606 = vmax.f32 %v604, %v605
      %v607 = vrot.slane %v606, 2
      %v608 = vmax.f32 %v606, %v607
      %v609 = vrot.slane %v608, 1
      %v610 = vmax.f32 %v608, %v609
      %v611 = vsel %vm575, %v548, -inf
      %v612 = vrot.slane %v611, 4
      %v613 = vmax.f32 %v611, %v612
      %v614 = vrot.slane %v613, 2
      %v615 = vmax.f32 %v613, %v614
      %v616 = vrot.slane %v615, 1
      %v617 = vmax.f32 %v615, %v616
      %v618 = vsel %vm575, %v549, -inf
      %v619 = vrot.slane %v618, 4
      %v620 = vmax.f32 %v618, %v619
      %v621 = vrot.slane %v620, 2
      %v622 = vmax.f32 %v620, %v621
      %v623 = vrot.slane %v622, 1
      %v624 = vmax.f32 %v622, %v623
      %v625 = vsel %vm575, %v550, -inf
      %v626 = vrot.slane %v625, 4
      %v627 = vmax.f32 %v625, %v626
      %v628 = vrot.slane %v627, 2
      %v629 = vmax.f32 %v627, %v628
      %v630 = vrot.slane %v629, 1
      %v631 = vmax.f32 %v629, %v630
      %v632 = vsel %vm575, %v551, -inf
      %v633 = vrot.slane %v632, 4
      %v634 = vmax.f32 %v632, %v633
      %v635 = vrot.slane %v634, 2
      %v636 = vmax.f32 %v634, %v635
      %v637 = vrot.slane %v636, 1
      %v638 = vmax.f32 %v636, %v637
      %v639 = vsel %vm575, %v552, -inf
      %v640 = vrot.slane %v639, 4
      %v641 = vmax.f32 %v639, %v640
      %v642 = vrot.slane %v641, 2
      %v643 = vmax.f32 %v641, %v642
      %v644 = vrot.slane %v643, 1
      %v645 = vmax.f32 %v643, %v644
      %v646 = vsel %vm575, %v553, -inf
      %v647 = vrot.slane %v646, 4
      %v648 = vmax.f32 %v646, %v647
      %v649 = vrot.slane %v648, 2
      %v650 = vmax.f32 %v648, %v649
      %v651 = vrot.slane %v650, 1
      %v652 = vmax.f32 %v650, %v651
      %v653 = vsel %vm575, %v554, -inf
      %v654 = vrot.slane %v653, 4
      %v655 = vmax.f32 %v653, %v654
      %v656 = vrot.slane %v655, 2
      %v657 = vmax.f32 %v655, %v656
      %v658 = vrot.slane %v657, 1
      %v659 = vmax.f32 %v657, %v658
      %v660 = vsel %vm575, %v555, -inf
      %v661 = vrot.slane %v660, 4
      %v662 = vmax.f32 %v660, %v661
      %v663 = vrot.slane %v662, 2
      %v664 = vmax.f32 %v662, %v663
      %v665 = vrot.slane %v664, 1
      %v666 = vmax.f32 %v664, %v665
      %v667 = vsel %vm575, %v556, -inf
      %v668 = vrot.slane %v667, 4
      %v669 = vmax.f32 %v667, %v668
      %v670 = vrot.slane %v669, 2
      %v671 = vmax.f32 %v669, %v670
      %v672 = vrot.slane %v671, 1
      %v673 = vmax.f32 %v671, %v672
      %v674 = vsel %vm575, %v557, -inf
      %v675 = vrot.slane %v674, 4
      %v676 = vmax.f32 %v674, %v675
      %v677 = vrot.slane %v676, 2
      %v678 = vmax.f32 %v676, %v677
      %v679 = vrot.slane %v678, 1
      %v680 = vmax.f32 %v678, %v679
      %v681 = vsel %vm575, %v558, -inf
      %v682 = vrot.slane %v681, 4
      %v683 = vmax.f32 %v681, %v682
      %v684 = vrot.slane %v683, 2
      %v685 = vmax.f32 %v683, %v684
      %v686 = vrot.slane %v685, 1
      %v687 = vmax.f32 %v685, %v686
      %v688 = vsel %vm575, %v559, -inf
      %v689 = vrot.slane %v688, 4
      %v690 = vmax.f32 %v688, %v689
      %v691 = vrot.slane %v690, 2
      %v692 = vmax.f32 %v690, %v691
      %v693 = vrot.slane %v692, 1
      %v694 = vmax.f32 %v692, %v693
      %v695 = vsel %vm575, %v560, -inf
      %v696 = vrot.slane %v695, 4
      %v697 = vmax.f32 %v695, %v696
      %v698 = vrot.slane %v697, 2
      %v699 = vmax.f32 %v697, %v698
      %v700 = vrot.slane %v699, 1
      %v701 = vmax.f32 %v699, %v700
      %v702 = vsel %vm575, %v561, -inf
      %v703 = vrot.slane %v702, 4
      %v704 = vmax.f32 %v702, %v703
      %v705 = vrot.slane %v704, 2
      %v706 = vmax.f32 %v704, %v705
      %v707 = vrot.slane %v706, 1
      %v708 = vmax.f32 %v706, %v707
      %v709 = vsel %vm575, %v562, -inf
      %v710 = vrot.slane %v709, 4
      %v711 = vmax.f32 %v709, %v710
      %v712 = vrot.slane %v711, 2
      %v713 = vmax.f32 %v711, %v712
      %v714 = vrot.slane %v713, 1
      %v715 = vmax.f32 %v713, %v714
      %v716 = vsel %vm575, %v563, -inf
      %v717 = vrot.slane %v716, 4
      %v718 = vmax.f32 %v716, %v717
      %v719 = vrot.slane %v718, 2
      %v720 = vmax.f32 %v718, %v719
      %v721 = vrot.slane %v720, 1
      %v722 = vmax.f32 %v720, %v721
      %v723 = vsel %vm575, %v564, -inf
      %v724 = vrot.slane %v723, 4
      %v725 = vmax.f32 %v723, %v724
      %v726 = vrot.slane %v725, 2
      %v727 = vmax.f32 %v725, %v726
      %v728 = vrot.slane %v727, 1
      %v729 = vmax.f32 %v727, %v728
      %v730 = vsel %vm575, %v565, -inf
      %v731 = vrot.slane %v730, 4
      %v732 = vmax.f32 %v730, %v731
      %v733 = vrot.slane %v732, 2
      %v734 = vmax.f32 %v732, %v733
      %v735 = vrot.slane %v734, 1
      %v736 = vmax.f32 %v734, %v735
      %v737 = vsel %vm575, %v566, -inf
      %v738 = vrot.slane %v737, 4
      %v739 = vmax.f32 %v737, %v738
      %v740 = vrot.slane %v739, 2
      %v741 = vmax.f32 %v739, %v740
      %v742 = vrot.slane %v741, 1
      %v743 = vmax.f32 %v741, %v742
      %v744 = vsel %vm575, %v567, -inf
      %v745 = vrot.slane %v744, 4
      %v746 = vmax.f32 %v744, %v745
      %v747 = vrot.slane %v746, 2
      %v748 = vmax.f32 %v746, %v747
      %v749 = vrot.slane %v748, 1
      %v750 = vmax.f32 %v748, %v749
      %v751 = vsel %vm575, %v568, -inf
      %v752 = vrot.slane %v751, 4
      %v753 = vmax.f32 %v751, %v752
      %v754 = vrot.slane %v753, 2
      %v755 = vmax.f32 %v753, %v754
      %v756 = vrot.slane %v755, 1
      %v757 = vmax.f32 %v755, %v756
      %v758 = vsel %vm575, %v569, -inf
      %v759 = vrot.slane %v758, 4
      %v760 = vmax.f32 %v758, %v759
      %v761 = vrot.slane %v760, 2
      %v762 = vmax.f32 %v760, %v761
      %v763 = vrot.slane %v762, 1
      %v764 = vmax.f32 %v762, %v763
      %v765 = vsel %vm575, %v570, -inf
      %v766 = vrot.slane %v765, 4
      %v767 = vmax.f32 %v765, %v766
      %v768 = vrot.slane %v767, 2
      %v769 = vmax.f32 %v767, %v768
      %v770 = vrot.slane %v769, 1
      %v771 = vmax.f32 %v769, %v770
      %v772 = vsel %vm575, %v571, -inf
      %v773 = vrot.slane %v772, 4
      %v774 = vmax.f32 %v772, %v773
      %v775 = vrot.slane %v774, 2
      %v776 = vmax.f32 %v774, %v775
      %v777 = vrot.slane %v776, 1
      %v778 = vmax.f32 %v776, %v777
      %v779 = vsel %vm575, %v572, -inf
      %v780 = vrot.slane %v779, 4
      %v781 = vmax.f32 %v779, %v780
      %v782 = vrot.slane %v781, 2
      %v783 = vmax.f32 %v781, %v782
      %v784 = vrot.slane %v783, 1
      %v785 = vmax.f32 %v783, %v784
      %v786 = vsel %vm575, %v573, -inf
      %v787 = vrot.slane %v786, 4
      %v788 = vmax.f32 %v786, %v787
      %v789 = vrot.slane %v788, 2
      %v790 = vmax.f32 %v788, %v789
      %v791 = vrot.slane %v790, 1
      %v792 = vmax.f32 %v790, %v791
      %v793 = vsel %vm575, %v574, -inf
      %v794 = vrot.slane %v793, 4
      %v795 = vmax.f32 %v793, %v794
      %v796 = vrot.slane %v795, 2
      %v797 = vmax.f32 %v795, %v796
      %v798 = vrot.slane %v797, 1
      %v799 = vmax.f32 %v797, %v798
      %vm832 = vcmask 1041409
      %v833 = vsel %vm832, %v589, %v582
      %vm834 = vcmask 1042434
      %v835 = vsel %vm834, %v596, %v833
      %vm836 = vcmask 1043459
      %v837 = vsel %vm836, %v603, %v835
      %vm838 = vcmask 1044484
      %v839 = vsel %vm838, %v610, %v837
      %vm840 = vcmask 1045509
      %v841 = vsel %vm840, %v617, %v839
      %vm842 = vcmask 1046534
      %v843 = vsel %vm842, %v624, %v841
      %vm844 = vcmask 1047559
      %v845 = vsel %vm844, %v631, %v843
      %v846 = vsel %vm832, %v645, %v638
      %v847 = vsel %vm834, %v652, %v846
      %v848 = vsel %vm836, %v659, %v847
      %v849 = vsel %vm838, %v666, %v848
      %v850 = vsel %vm840, %v673, %v849
      %v851 = vsel %vm842, %v680, %v850
      %v852 = vsel %vm844, %v687, %v851
      %v853 = vsel %vm832, %v701, %v694
      %v854 = vsel %vm834, %v708, %v853
      %v855 = vsel %vm836, %v715, %v854
      %v856 = vsel %vm838, %v722, %v855
      %v857 = vsel %vm840, %v729, %v856
      %v858 = vsel %vm842, %v736, %v857
      %v859 = vsel %vm844, %v743, %v858
      %v860 = vsel %vm832, %v757, %v750
      %v861 = vsel %vm834, %v764, %v860
      %v862 = vsel %vm836, %v771, %v861
      %v863 = vsel %vm838, %v778, %v862
      %v864 = vsel %vm840, %v785, %v863
      %v865 = vsel %vm842, %v792, %v864
      %v866 = vsel %vm844, %v799, %v865
      %871 = vst.msk [vmem:[%s172] sm:$0xff] %vm575, %v845
      %872 = vst.msk [vmem:[%s172 + $0x8] sm:$0xff] %vm575, %v852
      %873 = vst.msk [vmem:[%s172 + $0x10] sm:$0xff] %vm575, %v859
      %874 = vst.msk [vmem:[%s172 + $0x18] sm:$0xff] %vm575, %v866
      %s875 = smul.u32 4, %s14
      %p876 = scmp.lt.s32.totalorder %s875, 7
      %s877 = scalar_select %p876, %s875, 7
      %s878 = smul.addr %s877, 8
      %s879 = scalar_lea.vmem %s3, %s878
      // Predicated region
      $region33: #{net4_forward.2} parent=31 // pred_check
        %p880 = pneg %p100
      $region34: #{net4_forward.2} parent=31 // pred_check_branch
        %882 = sbr.rel (%p880) target = $region36
      $region35: #{net4_forward.2} parent=31 // pred_region
        %s883 = smul.u32 4, %s14
      $region36: #{net4_forward.2} parent=31 // pred_fallthru
        _
    $region32: #{net4_forward.2} parent=5 // pred_fallthru
      _
    %p884 = scmp.le.s32.totalorder 2, %s9
    // Predicated region
    $region37: #{net4_forward.2} parent=5 // pred_check
      %p885 = pneg %p884
    $region38: #{net4_forward.2} parent=5 // pred_check_branch
      %887 = sbr.rel (%p885) target = $region40
    $region39: #{net4_forward.2} parent=5 // pred_region
      %s888 = ssub.s32 %s9, 2
      // Predicated region
      $region41: #{net4_forward.2} parent=39 // pred_check
        %p889 = pneg %p106
      $region42: #{net4_forward.2} parent=39 // pred_check_branch
        %891 = sbr.rel (%p889) target = $region44
      $region43: #{net4_forward.2} parent=39 // pred_region
        %s892 = smul.u32 4, %s15
        %p893 = scmp.lt.s32.totalorder %s892, 7
        %s894 = scalar_select %p893, %s892, 7
        %s895 = smul.addr %s894, 8
        %s896 = scalar_lea.vmem %s3, %s895
      $region44: #{net4_forward.2} parent=39 // pred_fallthru
        _
    $region40: #{net4_forward.2} parent=5 // pred_fallthru
      _
  $region6: #{net4_forward.2} parent=0 // loop_footer
    %s13 = sadd.s32 1, %s9
  $region7: #{net4_forward.2} parent=0 // loop_footer_branch
    %8 = sbr.rel target = $region3
  $region8: #{net4_forward.2} parent=0 // loop_exit
    _

// kernel: net4_forward.3
$region0: #{net4_forward.3}
  #allocation0 [shape = 'u32[]', space=smem, size = 0x4, offset = 0x4, fixed_abs, tag = 'smem constant byte address 0x4 - core index']
  #allocation1 [shape = 'u32[144,128]{1,0:T(1,128)}', space=vmem, size = 0x12000, scoped, tag = 'internal scratch']
  #allocation2 [shape = 'f32[1]{0:T(128)S(6)}', space=smem, size = 0x200, scoped, tag = 'scoped memory for net4_forward.3']
  %s0 = inlined_call_operand.vmem [shape: f32[64,864], index: 0, kind: input, shape index: {}]
  %s1 = inlined_call_operand.vmem [shape: f32[864,64], index: 1, kind: input, shape index: {}]
  %s2 = inlined_call_operand.vmem [shape: f32[1,64], index: 2, kind: input, shape index: {}]
  %s3 = inlined_call_operand.vmem [shape: f32[256,32], index: 3, kind: input, shape index: {}]
  %s4 = inlined_call_operand.vmem [shape: f32[1,32], index: 4, kind: input, shape index: {}]
  %s5 = inlined_call_operand.vmem [shape: f32[1,32], index: 5, kind: input, shape index: {}]
  %s6 = inlined_call_operand.<no memory space> [shape: f32[1], index: 6, kind: input, shape index: {}]
  %s7 = inlined_call_operand.vmem [shape: f32[2,1], index: 7, kind: output, shape index: {}]
  %s8 = sld [smem:[#allocation0]]
  $region38: #{net4_forward.3} parent=0
    _
  %s10 = ssub.s32 1, %s8
  %s11 = scalar_select 0, %s10, %s8
  %12 = sst [smem:[#allocation2]] %s6
  // Predicated region
  $region2: #{net4_forward.3} parent=0 // pred_check
    _
  $region3: #{net4_forward.3} parent=0 // pred_check_branch
    %14 = sbr.rel (0) target = $region5
  $region4: #{net4_forward.3} parent=0 // pred_region
    _
  $region5: #{net4_forward.3} parent=0 // pred_fallthru
    _
  // Predicated region
  $region6: #{net4_forward.3} parent=0 // pred_check
    _
  $region7: #{net4_forward.3} parent=0 // pred_check_branch
    %16 = sbr.rel (0) target = $region9
  $region8: #{net4_forward.3} parent=0 // pred_region
    _
  $region9: #{net4_forward.3} parent=0 // pred_fallthru
    _
  // Predicated region
  $region10: #{net4_forward.3} parent=0 // pred_check
    _
  $region11: #{net4_forward.3} parent=0 // pred_check_branch
    %18 = sbr.rel (0) target = $region13
  $region12: #{net4_forward.3} parent=0 // pred_region
    _
  $region13: #{net4_forward.3} parent=0 // pred_fallthru
    _
  // Predicated region
  $region14: #{net4_forward.3} parent=0 // pred_check
    _
  $region15: #{net4_forward.3} parent=0 // pred_check_branch
    %20 = sbr.rel (0) target = $region17
  $region16: #{net4_forward.3} parent=0 // pred_region
    _
  $region17: #{net4_forward.3} parent=0 // pred_fallthru
    _
  // Predicated region
  $region18: #{net4_forward.3} parent=0 // pred_check
    _
  $region19: #{net4_forward.3} parent=0 // pred_check_branch
    %22 = sbr.rel (0) target = $region21
  $region20: #{net4_forward.3} parent=0 // pred_region
    _
  $region21: #{net4_forward.3} parent=0 // pred_fallthru
    _
  // Predicated region
  $region22: #{net4_forward.3} parent=0 // pred_check
    _
  $region23: #{net4_forward.3} parent=0 // pred_check_branch
    %24 = sbr.rel (0) target = $region25
  $region24: #{net4_forward.3} parent=0 // pred_region
    _
  $region25: #{net4_forward.3} parent=0 // pred_fallthru
    _
  // Predicated region
  $region26: #{net4_forward.3} parent=0 // pred_check
    _
  $region27: #{net4_forward.3} parent=0 // pred_check_branch
    %26 = sbr.rel (0) target = $region29
  $region28: #{net4_forward.3} parent=0 // pred_region
    _
  $region29: #{net4_forward.3} parent=0 // pred_fallthru
    _
  %v27 = vld [vmem:[%s0] sm:$0xff]
  %v28 = vld [vmem:[%s0 + $0x8] sm:$0xff]
  %v29 = vld [vmem:[%s0 + $0x10] sm:$0xff]
  %v30 = vld [vmem:[%s0 + $0x18] sm:$0xff]
  %v31 = vld [vmem:[%s0 + $0x20] sm:$0xff]
  %v32 = vld [vmem:[%s0 + $0x28] sm:$0xff]
  %v33 = vld [vmem:[%s0 + $0x30] sm:$0xff]
  %v34 = vld [vmem:[%s0 + $0x38] sm:$0xff]
  %v35 = vld [vmem:[%s0 + $0x40] sm:$0xff]
  %v36 = vld [vmem:[%s0 + $0x48] sm:$0xff]
  %v37 = vld [vmem:[%s0 + $0x50] sm:$0xff]
  %v38 = vld [vmem:[%s0 + $0x58] sm:$0xff]
  %v39 = vld [vmem:[%s0 + $0x60] sm:$0xff]
  %v40 = vld [vmem:[%s0 + $0x68] sm:$0xff]
  %v41 = vld [vmem:[%s0 + $0x70] sm:$0xff]
  %v42 = vld [vmem:[%s0 + $0x78] sm:$0xff]
  %v43 = vld [vmem:[%s0 + $0x80] sm:$0xff]
  %v44 = vld [vmem:[%s0 + $0x88] sm:$0xff]
  %v45 = vld [vmem:[%s0 + $0x90] sm:$0xff]
  %v46 = vld [vmem:[%s0 + $0x98] sm:$0xff]
  %v47 = vld [vmem:[%s0 + $0xa0] sm:$0xff]
  %v48 = vld [vmem:[%s0 + $0xa8] sm:$0xff]
  %v49 = vld [vmem:[%s0 + $0xb0] sm:$0xff]
  %v50 = vld [vmem:[%s0 + $0xb8] sm:$0xff]
  %v51 = vld [vmem:[%s0 + $0xc0] sm:$0xff]
  %v52 = vld [vmem:[%s0 + $0xc8] sm:$0xff]
  %v53 = vld [vmem:[%s0 + $0xd0] sm:$0xff]
  %v54 = vld [vmem:[%s0 + $0xd8] sm:$0xff]
  %v55 = vld [vmem:[%s0 + $0xe0] sm:$0xff]
  %v56 = vld [vmem:[%s0 + $0xe8] sm:$0xff]
  %v57 = vld [vmem:[%s0 + $0xf0] sm:$0xff]
  %v58 = vld [vmem:[%s0 + $0xf8] sm:$0xff]
  %v59 = vld [vmem:[%s0 + $0x100] sm:$0xff]
  %v60 = vld [vmem:[%s0 + $0x108] sm:$0xff]
  %v61 = vld [vmem:[%s0 + $0x110] sm:$0xff]
  %v62 = vld [vmem:[%s0 + $0x118] sm:$0xff]
  %v63 = vld [vmem:[%s0 + $0x120] sm:$0xff]
  %v64 = vld [vmem:[%s0 + $0x128] sm:$0xff]
  %v65 = vld [vmem:[%s0 + $0x130] sm:$0xff]
  %v66 = vld [vmem:[%s0 + $0x138] sm:$0xff]
  %v67 = vld [vmem:[%s0 + $0x140] sm:$0xff]
  %v68 = vld [vmem:[%s0 + $0x148] sm:$0xff]
  %v69 = vld [vmem:[%s0 + $0x150] sm:$0xff]
  %v70 = vld [vmem:[%s0 + $0x158] sm:$0xff]
  %v71 = vld [vmem:[%s0 + $0x160] sm:$0xff]
  %v72 = vld [vmem:[%s0 + $0x168] sm:$0xff]
  %v73 = vld [vmem:[%s0 + $0x170] sm:$0xff]
  %v74 = vld [vmem:[%s0 + $0x178] sm:$0xff]
  %v75 = vld [vmem:[%s0 + $0x180] sm:$0xff]
  %v76 = vld [vmem:[%s0 + $0x188] sm:$0xff]
  %v77 = vld [vmem:[%s0 + $0x190] sm:$0xff]
  %v78 = vld [vmem:[%s0 + $0x198] sm:$0xff]
  %v79 = vld [vmem:[%s0 + $0x1a0] sm:$0xff]
  %v80 = vld [vmem:[%s0 + $0x1a8] sm:$0xff]
  %v81 = vld [vmem:[%s0 + $0x1b0] sm:$0xff]
  %v82 = vld [vmem:[%s0 + $0x1b8] sm:$0xff]
  %v83 = vld [vmem:[%s1] sm:$0xff]
  %v84 = vld [vmem:[%s1 + $0x8] sm:$0xff]
  %v85 = vld [vmem:[%s1 + $0x10] sm:$0xff]
  %v86 = vld [vmem:[%s1 + $0x18] sm:$0xff]
  %v87 = vld [vmem:[%s1 + $0x20] sm:$0xff]
  %v88 = vld [vmem:[%s1 + $0x28] sm:$0xff]
  %v89 = vld [vmem:[%s1 + $0x30] sm:$0xff]
  %v90 = vld [vmem:[%s1 + $0x38] sm:$0xff]
  %v91 = vld [vmem:[%s1 + $0x40] sm:$0xff]
  %v92 = vld [vmem:[%s1 + $0x48] sm:$0xff]
  %v93 = vld [vmem:[%s1 + $0x50] sm:$0xff]
  %v94 = vld [vmem:[%s1 + $0x58] sm:$0xff]
  %v95 = vld [vmem:[%s1 + $0x60] sm:$0xff]
  %v96 = vld [vmem:[%s1 + $0x68] sm:$0xff]
  %v97 = vld [vmem:[%s1 + $0x70] sm:$0xff]
  %v98 = vld [vmem:[%s1 + $0x78] sm:$0xff]
  %v99 = vld [vmem:[%s1 + $0x80] sm:$0xff]
  %v100 = vld [vmem:[%s1 + $0x88] sm:$0xff]
  %v101 = vld [vmem:[%s1 + $0x90] sm:$0xff]
  %v102 = vld [vmem:[%s1 + $0x98] sm:$0xff]
  %v103 = vld [vmem:[%s1 + $0xa0] sm:$0xff]
  %v104 = vld [vmem:[%s1 + $0xa8] sm:$0xff]
  %v105 = vld [vmem:[%s1 + $0xb0] sm:$0xff]
  %v106 = vld [vmem:[%s1 + $0xb8] sm:$0xff]
  %v107 = vld [vmem:[%s1 + $0xc0] sm:$0xff]
  %v108 = vld [vmem:[%s1 + $0xc8] sm:$0xff]
  %v109 = vld [vmem:[%s1 + $0xd0] sm:$0xff]
  %v110 = vld [vmem:[%s1 + $0xd8] sm:$0xff]
  %v111 = vld [vmem:[%s1 + $0xe0] sm:$0xff]
  %v112 = vld [vmem:[%s1 + $0xe8] sm:$0xff]
  %v113 = vld [vmem:[%s1 + $0xf0] sm:$0xff]
  %v114 = vld [vmem:[%s1 + $0xf8] sm:$0xff]
  %v115 = vld [vmem:[%s1 + $0x100] sm:$0xff]
  %v116 = vld [vmem:[%s1 + $0x108] sm:$0xff]
  %v117 = vld [vmem:[%s1 + $0x110] sm:$0xff]
  %v118 = vld [vmem:[%s1 + $0x118] sm:$0xff]
  %v119 = vld [vmem:[%s1 + $0x120] sm:$0xff]
  %v120 = vld [vmem:[%s1 + $0x128] sm:$0xff]
  %v121 = vld [vmem:[%s1 + $0x130] sm:$0xff]
  %v122 = vld [vmem:[%s1 + $0x138] sm:$0xff]
  %v123 = vld [vmem:[%s1 + $0x140] sm:$0xff]
  %v124 = vld [vmem:[%s1 + $0x148] sm:$0xff]
  %v125 = vld [vmem:[%s1 + $0x150] sm:$0xff]
  %v126 = vld [vmem:[%s1 + $0x158] sm:$0xff]
  %v127 = vld [vmem:[%s1 + $0x160] sm:$0xff]
  %v128 = vld [vmem:[%s1 + $0x168] sm:$0xff]
  %v129 = vld [vmem:[%s1 + $0x170] sm:$0xff]
  %v130 = vld [vmem:[%s1 + $0x178] sm:$0xff]
  %v131 = vld [vmem:[%s1 + $0x180] sm:$0xff]
  %v132 = vld [vmem:[%s1 + $0x188] sm:$0xff]
  %v133 = vld [vmem:[%s1 + $0x190] sm:$0xff]
  %v134 = vld [vmem:[%s1 + $0x198] sm:$0xff]
  %v135 = vld [vmem:[%s1 + $0x1a0] sm:$0xff]
  %v136 = vld [vmem:[%s1 + $0x1a8] sm:$0xff]
  %v137 = vld [vmem:[%s1 + $0x1b0] sm:$0xff]
  %v138 = vld [vmem:[%s1 + $0x1b8] sm:$0xff]
  %v139 = vld [vmem:[%s1 + $0x1c0] sm:$0xff]
  %v140 = vld [vmem:[%s1 + $0x1c8] sm:$0xff]
  %v141 = vld [vmem:[%s1 + $0x1d0] sm:$0xff]
  %v142 = vld [vmem:[%s1 + $0x1d8] sm:$0xff]
  %v143 = vld [vmem:[%s1 + $0x1e0] sm:$0xff]
  %v144 = vld [vmem:[%s1 + $0x1e8] sm:$0xff]
  %v145 = vld [vmem:[%s1 + $0x1f0] sm:$0xff]
  %v146 = vld [vmem:[%s1 + $0x1f8] sm:$0xff]
  %v147 = vld [vmem:[%s1 + $0x200] sm:$0xff]
  %v148 = vld [vmem:[%s1 + $0x208] sm:$0xff]
  %v149 = vld [vmem:[%s1 + $0x210] sm:$0xff]
  %v150 = vld [vmem:[%s1 + $0x218] sm:$0xff]
  %v151 = vld [vmem:[%s1 + $0x220] sm:$0xff]
  %v152 = vld [vmem:[%s1 + $0x228] sm:$0xff]
  %v153 = vld [vmem:[%s1 + $0x230] sm:$0xff]
  %v154 = vld [vmem:[%s1 + $0x238] sm:$0xff]
  %v155 = vld [vmem:[%s1 + $0x240] sm:$0xff]
  %v156 = vld [vmem:[%s1 + $0x248] sm:$0xff]
  %v157 = vld [vmem:[%s1 + $0x250] sm:$0xff]
  %v158 = vld [vmem:[%s1 + $0x258] sm:$0xff]
  %v159 = vld [vmem:[%s1 + $0x260] sm:$0xff]
  %v160 = vld [vmem:[%s1 + $0x268] sm:$0xff]
  %v161 = vld [vmem:[%s1 + $0x270] sm:$0xff]
  %v162 = vld [vmem:[%s1 + $0x278] sm:$0xff]
  %v163 = vld [vmem:[%s1 + $0x280] sm:$0xff]
  %v164 = vld [vmem:[%s1 + $0x288] sm:$0xff]
  %v165 = vld [vmem:[%s1 + $0x290] sm:$0xff]
  %v166 = vld [vmem:[%s1 + $0x298] sm:$0xff]
  %v167 = vld [vmem:[%s1 + $0x2a0] sm:$0xff]
  %v168 = vld [vmem:[%s1 + $0x2a8] sm:$0xff]
  %v169 = vld [vmem:[%s1 + $0x2b0] sm:$0xff]
  %v170 = vld [vmem:[%s1 + $0x2b8] sm:$0xff]
  %v171 = vld [vmem:[%s1 + $0x2c0] sm:$0xff]
  %v172 = vld [vmem:[%s1 + $0x2c8] sm:$0xff]
  %v173 = vld [vmem:[%s1 + $0x2d0] sm:$0xff]
  %v174 = vld [vmem:[%s1 + $0x2d8] sm:$0xff]
  %v175 = vld [vmem:[%s1 + $0x2e0] sm:$0xff]
  %v176 = vld [vmem:[%s1 + $0x2e8] sm:$0xff]
  %v177 = vld [vmem:[%s1 + $0x2f0] sm:$0xff]
  %v178 = vld [vmem:[%s1 + $0x2f8] sm:$0xff]
  %v179 = vld [vmem:[%s1 + $0x300] sm:$0xff]
  %v180 = vld [vmem:[%s1 + $0x308] sm:$0xff]
  %v181 = vld [vmem:[%s1 + $0x310] sm:$0xff]
  %v182 = vld [vmem:[%s1 + $0x318] sm:$0xff]
  %v183 = vld [vmem:[%s1 + $0x320] sm:$0xff]
  %v184 = vld [vmem:[%s1 + $0x328] sm:$0xff]
  %v185 = vld [vmem:[%s1 + $0x330] sm:$0xff]
  %v186 = vld [vmem:[%s1 + $0x338] sm:$0xff]
  %v187 = vld [vmem:[%s1 + $0x340] sm:$0xff]
  %v188 = vld [vmem:[%s1 + $0x348] sm:$0xff]
  %v189 = vld [vmem:[%s1 + $0x350] sm:$0xff]
  %v190 = vld [vmem:[%s1 + $0x358] sm:$0xff]
  %v191 = vld [vmem:[%s2] sm:$0x1]
  %v193 = vlaneseq
  %v194 = vshrl.u32 %v193, 7
  %v195 = vsub.s32 0, %v194
  %v196 = vrot.slane %v191, %v195
  %vm198 = vcmask 785408
  %v200 = vsel %vm198, %v33, 0
  %v203 = vsel %vm198, %v40, 0
  %v206 = vsel %vm198, %v47, 0
  %v209 = vsel %vm198, %v54, 0
  %v212 = vsel %vm198, %v61, 0
  %v215 = vsel %vm198, %v68, 0
  %v218 = vsel %vm198, %v75, 0
  %v221 = vsel %vm198, %v82, 0
  %223 = vmatprep.subr.mxu0 0.0
  %224 = vmatpush1.msra.mxu0 %v83
  %225 = vmatprep.subr.mxu0 0.0
  %226 = vmatpush1.msra.mxu0 %v84
  %227 = vmatprep.subr.mxu0 0.0
  %228 = vmatpush1.msra.mxu0 %v85
  %229 = vmatprep.subr.mxu0 0.0
  %230 = vmatpush1.msra.mxu0 %v86
  %231 = vmatprep.subr.mxu0 0.0
  %232 = vmatpush1.msra.mxu0 %v87
  %233 = vmatprep.subr.mxu0 0.0
  %234 = vmatpush1.msra.mxu0 %v88
  %235 = vmatprep.subr.mxu0 0.0
  %236 = vmatpush1.msra.mxu0 %v89
  %237 = vmatprep.subr.mxu0 0.0
  %238 = vmatpush1.msra.mxu0 %v90
  %239 = vmatprep.subr.mxu0 0.0
  %240 = vmatpush1.msra.mxu0 %v91
  %241 = vmatprep.subr.mxu0 0.0
  %242 = vmatpush1.msra.mxu0 %v92
  %243 = vmatprep.subr.mxu0 0.0
  %244 = vmatpush1.msra.mxu0 %v93
  %245 = vmatprep.subr.mxu0 0.0
  %246 = vmatpush1.msra.mxu0 %v94
  %247 = vmatprep.subr.mxu0 0.0
  %248 = vmatpush1.msra.mxu0 %v95
  %249 = vmatprep.subr.mxu0 0.0
  %250 = vmatpush1.msra.mxu0 %v96
  %251 = vmatprep.subr.mxu0 0.0
  %252 = vmatpush1.msra.mxu0 %v97
  %253 = vmatprep.subr.mxu0 0.0
  %254 = vmatpush1.msra.mxu0 %v98
  %255 = vmatprep.subr.mxu0 0.0
  %256 = vmatpush1.msra.mxu0 %v99
  %257 = vmatprep.subr.mxu0 0.0
  %258 = vmatpush1.msra.mxu0 %v100
  %259 = vmatprep.subr.mxu0 0.0
  %260 = vmatpush1.msra.mxu0 %v101
  %261 = vmatprep.subr.mxu0 0.0
  %262 = vmatpush1.msra.mxu0 %v102
  %263 = vmatprep.subr.mxu0 0.0
  %264 = vmatpush1.msra.mxu0 %v103
  %265 = vmatprep.subr.mxu0 0.0
  %266 = vmatpush1.msra.mxu0 %v104
  %267 = vmatprep.subr.mxu0 0.0
  %268 = vmatpush1.msra.mxu0 %v105
  %269 = vmatprep.subr.mxu0 0.0
  %270 = vmatpush1.msra.mxu0 %v106
  %271 = vmatprep.subr.mxu0 0.0
  %272 = vmatpush1.msra.mxu0 %v107
  %273 = vmatprep.subr.mxu0 0.0
  %274 = vmatpush1.msra.mxu0 %v108
  %275 = vmatprep.subr.mxu0 0.0
  %276 = vmatpush1.msra.mxu0 %v109
  %277 = vmatprep.subr.mxu0 0.0
  %278 = vmatpush1.msra.mxu0 %v110
  %279 = vmatprep.subr.mxu0 0.0
  %280 = vmatpush1.msra.mxu0 %v111
  %281 = vmatprep.subr.mxu0 0.0
  %282 = vmatpush1.msra.mxu0 %v112
  %283 = vmatprep.subr.mxu0 0.0
  %284 = vmatpush1.msra.mxu0 %v113
  %285 = vmatprep.subr.mxu0 0.0
  %286 = vmatpush1.msra.mxu0 %v114
  %287 = vmatprep.mubr.f32.mxu0 %v28
  %288 = vmatmul.mubr.f32.gmra.mrb[0].mxu0 %v27
  %v289 = vpop.f32.mrb[0].mxu0
  %v290 = vadd.f32 %v196, %v289
  %v291 = vpop.f32.mrb[0].mxu0
  %292 = vmatprep.mubr.f32.mxu0 %v35
  %293 = vmatmul.mubr.f32.gmra.mrb[0].mxu0 %v34
  %v294 = vpop.f32.mrb[0].mxu0
  %v295 = vadd.f32 %v196, %v294
  %v296 = vpop.f32.mrb[0].mxu0
  %297 = vmatprep.mubr.f32.mxu0 %v42
  %298 = vmatmul.mubr.f32.gmra.mrb[0].mxu0 %v41
  %v299 = vpop.f32.mrb[0].mxu0
  %v300 = vadd.f32 %v196, %v299
  %v301 = vpop.f32.mrb[0].mxu0
  %302 = vmatprep.mubr.f32.mxu0 %v49
  %303 = vmatmul.mubr.f32.gmra.mrb[0].mxu0 %v48
  %v304 = vpop.f32.mrb[0].mxu0
  %v305 = vadd.f32 %v196, %v304
  %v306 = vpop.f32.mrb[0].mxu0
  %307 = vmatprep.mubr.f32.mxu0 %v56
  %308 = vmatmul.mubr.f32.gmra.mrb[0].mxu0 %v55
  %v309 = vpop.f32.mrb[0].mxu0
  %v310 = vadd.f32 %v196, %v309
  %v311 = vpop.f32.mrb[0].mxu0
  %312 = vmatprep.mubr.f32.mxu0 %v63
  %313 = vmatmul.mubr.f32.gmra.mrb[0].mxu0 %v62
  %v314 = vpop.f32.mrb[0].mxu0
  %v315 = vadd.f32 %v196, %v314
  %v316 = vpop.f32.mrb[0].mxu0
  %317 = vmatprep.mubr.f32.mxu0 %v70
  %318 = vmatmul.mubr.f32.gmra.mrb[0].mxu0 %v69
  %v319 = vpop.f32.mrb[0].mxu0
  %v320 = vadd.f32 %v196, %v319
  %v321 = vpop.f32.mrb[0].mxu0
  %322 = vmatprep.mubr.f32.mxu0 %v77
  %323 = vmatmul.mubr.f32.gmra.mrb[0].mxu0 %v76
  %v324 = vpop.f32.mrb[0].mxu0
  %v325 = vadd.f32 %v196, %v324
  %v326 = vpop.f32.mrb[0].mxu0
  %327 = vdwg.mxu0
  %328 = vmatprep.subr.mxu0 0.0
  %329 = vmatpush1.msra.mxu0 %v115
  %330 = vmatprep.subr.mxu0 0.0
  %331 = vmatpush1.msra.mxu0 %v116
  %332 = vmatprep.subr.mxu0 0.0
  %333 = vmatpush1.msra.mxu0 %v117
  %334 = vmatprep.subr.mxu0 0.0
  %335 = vmatpush1.msra.mxu0 %v118
  %336 = vmatprep.subr.mxu0 0.0
  %337 = vmatpush1.msra.mxu0 %v119
  %338 = vmatprep.subr.mxu0 0.0
  %339 = vmatpush1.msra.mxu0 %v120
  %340 = vmatprep.subr.mxu0 0.0
  %341 = vmatpush1.msra.mxu0 %v121
  %342 = vmatprep.subr.mxu0 0.0
  %343 = vmatpush1.msra.mxu0 %v122
  %344 = vmatprep.subr.mxu0 0.0
  %345 = vmatpush1.msra.mxu0 %v123
  %346 = vmatprep.subr.mxu0 0.0
  %347 = vmatpush1.msra.mxu0 %v124
  %348 = vmatprep.subr.mxu0 0.0
  %349 = vmatpush1.msra.mxu0 %v125
  %350 = vmatprep.subr.mxu0 0.0
  %351 = vmatpush1.msra.mxu0 %v126
  %352 = vmatprep.subr.mxu0 0.0
  %353 = vmatpush1.msra.mxu0 %v127
  %354 = vmatprep.subr.mxu0 0.0
  %355 = vmatpush1.msra.mxu0 %v128
  %356 = vmatprep.subr.mxu0 0.0
  %357 = vmatpush1.msra.mxu0 %v129
  %358 = vmatprep.subr.mxu0 0.0
  %359 = vmatpush1.msra.mxu0 %v130
  %360 = vmatprep.subr.mxu0 0.0
  %361 = vmatpush1.msra.mxu0 %v131
  %362 = vmatprep.subr.mxu0 0.0
  %363 = vmatpush1.msra.mxu0 %v132
  %364 = vmatprep.subr.mxu0 0.0
  %365 = vmatpush1.msra.mxu0 %v133
  %366 = vmatprep.subr.mxu0 0.0
  %367 = vmatpush1.msra.mxu0 %v134
  %368 = vmatprep.subr.mxu0 0.0
  %369 = vmatpush1.msra.mxu0 %v135
  %370 = vmatprep.subr.mxu0 0.0
  %371 = vmatpush1.msra.mxu0 %v136
  %372 = vmatprep.subr.mxu0 0.0
  %373 = vmatpush1.msra.mxu0 %v137
  %374 = vmatprep.subr.mxu0 0.0
  %375 = vmatpush1.msra.mxu0 %v138
  %376 = vmatprep.subr.mxu0 0.0
  %377 = vmatpush1.msra.mxu0 %v139
  %378 = vmatprep.subr.mxu0 0.0
  %379 = vmatpush1.msra.mxu0 %v140
  %380 = vmatprep.subr.mxu0 0.0
  %381 = vmatpush1.msra.mxu0 %v141
  %382 = vmatprep.subr.mxu0 0.0
  %383 = vmatpush1.msra.mxu0 %v142
  %384 = vmatprep.subr.mxu0 0.0
  %385 = vmatpush1.msra.mxu0 %v143
  %386 = vmatprep.subr.mxu0 0.0
  %387 = vmatpush1.msra.mxu0 %v144
  %388 = vmatprep.subr.mxu0 0.0
  %389 = vmatpush1.msra.mxu0 %v145
  %390 = vmatprep.subr.mxu0 0.0
  %391 = vmatpush1.msra.mxu0 %v146
  %392 = vmatprep.mubr.f32.mxu0 %v30
  %393 = vmatmul.mubr.f32.gmra.mrb[0].mxu0 %v29
  %v394 = vpop.f32.mrb[0].mxu0
  %v395 = vadd.f32 %v290, %v394
  %v396 = vpop.f32.mrb[0].mxu0
  %397 = vmatprep.mubr.f32.mxu0 %v37
  %398 = vmatmul.mubr.f32.gmra.mrb[0].mxu0 %v36
  %v399 = vpop.f32.mrb[0].mxu0
  %v400 = vadd.f32 %v295, %v399
  %v401 = vpop.f32.mrb[0].mxu0
  %402 = vmatprep.mubr.f32.mxu0 %v44
  %403 = vmatmul.mubr.f32.gmra.mrb[0].mxu0 %v43
  %v404 = vpop.f32.mrb[0].mxu0
  %v405 = vadd.f32 %v300, %v404
  %v406 = vpop.f32.mrb[0].mxu0
  %407 = vmatprep.mubr.f32.mxu0 %v51
  %408 = vmatmul.mubr.f32.gmra.mrb[0].mxu0 %v50
  %v409 = vpop.f32.mrb[0].mxu0
  %v410 = vadd.f32 %v305, %v409
  %v411 = vpop.f32.mrb[0].mxu0
  %412 = vmatprep.mubr.f32.mxu0 %v58
  %413 = vmatmul.mubr.f32.gmra.mrb[0].mxu0 %v57
  %v414 = vpop.f32.mrb[0].mxu0
  %v415 = vadd.f32 %v310, %v414
  %v416 = vpop.f32.mrb[0].mxu0
  %417 = vmatprep.mubr.f32.mxu0 %v65
  %418 = vmatmul.mubr.f32.gmra.mrb[0].mxu0 %v64
  %v419 = vpop.f32.mrb[0].mxu0
  %v420 = vadd.f32 %v315, %v419
  %v421 = vpop.f32.mrb[0].mxu0
  %422 = vmatprep.mubr.f32.mxu0 %v72
  %423 = vmatmul.mubr.f32.gmra.mrb[0].mxu0 %v71
  %v424 = vpop.f32.mrb[0].mxu0
  %v425 = vadd.f32 %v320, %v424
  %v426 = vpop.f32.mrb[0].mxu0
  %427 = vmatprep.mubr.f32.mxu0 %v79
  %428 = vmatmul.mubr.f32.gmra.mrb[0].mxu0 %v78
  %v429 = vpop.f32.mrb[0].mxu0
  %v430 = vadd.f32 %v325, %v429
  %v431 = vpop.f32.mrb[0].mxu0
  %432 = vdwg.mxu0
  %433 = vmatprep.subr.mxu0 0.0
  %434 = vmatpush1.msra.mxu0 %v147
  %435 = vmatprep.subr.mxu0 0.0
  %436 = vmatpush1.msra.mxu0 %v148
  %437 = vmatprep.subr.mxu0 0.0
  %438 = vmatpush1.msra.mxu0 %v149
  %439 = vmatprep.subr.mxu0 0.0
  %440 = vmatpush1.msra.mxu0 %v150
  %441 = vmatprep.subr.mxu0 0.0
  %442 = vmatpush1.msra.mxu0 %v151
  %443 = vmatprep.subr.mxu0 0.0
  %444 = vmatpush1.msra.mxu0 %v152
  %445 = vmatprep.subr.mxu0 0.0
  %446 = vmatpush1.msra.mxu0 %v153
  %447 = vmatprep.subr.mxu0 0.0
  %448 = vmatpush1.msra.mxu0 %v154
  %449 = vmatprep.subr.mxu0 0.0
  %450 = vmatpush1.msra.mxu0 %v155
  %451 = vmatprep.subr.mxu0 0.0
  %452 = vmatpush1.msra.mxu0 %v156
  %453 = vmatprep.subr.mxu0 0.0
  %454 = vmatpush1.msra.mxu0 %v157
  %455 = vmatprep.subr.mxu0 0.0
  %456 = vmatpush1.msra.mxu0 %v158
  %457 = vmatprep.subr.mxu0 0.0
  %458 = vmatpush1.msra.mxu0 %v159
  %459 = vmatprep.subr.mxu0 0.0
  %460 = vmatpush1.msra.mxu0 %v160
  %461 = vmatprep.subr.mxu0 0.0
  %462 = vmatpush1.msra.mxu0 %v161
  %463 = vmatprep.subr.mxu0 0.0
  %464 = vmatpush1.msra.mxu0 %v162
  %465 = vmatprep.subr.mxu0 0.0
  %466 = vmatpush1.msra.mxu0 %v163
  %467 = vmatprep.subr.mxu0 0.0
  %468 = vmatpush1.msra.mxu0 %v164
  %469 = vmatprep.subr.mxu0 0.0
  %470 = vmatpush1.msra.mxu0 %v165
  %471 = vmatprep.subr.mxu0 0.0
  %472 = vmatpush1.msra.mxu0 %v166
  %473 = vmatprep.subr.mxu0 0.0
  %474 = vmatpush1.msra.mxu0 %v167
  %475 = vmatprep.subr.mxu0 0.0
  %476 = vmatpush1.msra.mxu0 %v168
  %477 = vmatprep.subr.mxu0 0.0
  %478 = vmatpush1.msra.mxu0 %v169
  %479 = vmatprep.subr.mxu0 0.0
  %480 = vmatpush1.msra.mxu0 %v170
  %481 = vmatprep.subr.mxu0 0.0
  %482 = vmatpush1.msra.mxu0 %v171
  %483 = vmatprep.subr.mxu0 0.0
  %484 = vmatpush1.msra.mxu0 %v172
  %485 = vmatprep.subr.mxu0 0.0
  %486 = vmatpush1.msra.mxu0 %v173
  %487 = vmatprep.subr.mxu0 0.0
  %488 = vmatpush1.msra.mxu0 %v174
  %489 = vmatprep.subr.mxu0 0.0
  %490 = vmatpush1.msra.mxu0 %v175
  %491 = vmatprep.subr.mxu0 0.0
  %492 = vmatpush1.msra.mxu0 %v176
  %493 = vmatprep.subr.mxu0 0.0
  %494 = vmatpush1.msra.mxu0 %v177
  %495 = vmatprep.subr.mxu0 0.0
  %496 = vmatpush1.msra.mxu0 %v178
  %497 = vmatprep.mubr.f32.mxu0 %v32
  %498 = vmatmul.mubr.f32.gmra.mrb[0].mxu0 %v31
  %v499 = vpop.f32.mrb[0].mxu0
  %v500 = vadd.f32 %v395, %v499
  %v501 = vpop.f32.mrb[0].mxu0
  %502 = vmatprep.mubr.f32.mxu0 %v39
  %503 = vmatmul.mubr.f32.gmra.mrb[0].mxu0 %v38
  %v504 = vpop.f32.mrb[0].mxu0
  %v505 = vadd.f32 %v400, %v504
  %v506 = vpop.f32.mrb[0].mxu0
  %507 = vmatprep.mubr.f32.mxu0 %v46
  %508 = vmatmul.mubr.f32.gmra.mrb[0].mxu0 %v45
  %v509 = vpop.f32.mrb[0].mxu0
  %v510 = vadd.f32 %v405, %v509
  %v511 = vpop.f32.mrb[0].mxu0
  %512 = vmatprep.mubr.f32.mxu0 %v53
  %513 = vmatmul.mubr.f32.gmra.mrb[0].mxu0 %v52
  %v514 = vpop.f32.mrb[0].mxu0
  %v515 = vadd.f32 %v410, %v514
  %v516 = vpop.f32.mrb[0].mxu0
  %517 = vmatprep.mubr.f32.mxu0 %v60
  %518 = vmatmul.mubr.f32.gmra.mrb[0].mxu0 %v59
  %v519 = vpop.f32.mrb[0].mxu0
  %v520 = vadd.f32 %v415, %v519
  %v521 = vpop.f32.mrb[0].mxu0
  %522 = vmatprep.mubr.f32.mxu0 %v67
  %523 = vmatmul.mubr.f32.gmra.mrb[0].mxu0 %v66
  %v524 = vpop.f32.mrb[0].mxu0
  %v525 = vadd.f32 %v420, %v524
  %v526 = vpop.f32.mrb[0].mxu0
  %527 = vmatprep.mubr.f32.mxu0 %v74
  %528 = vmatmul.mubr.f32.gmra.mrb[0].mxu0 %v73
  %v529 = vpop.f32.mrb[0].mxu0
  %v530 = vadd.f32 %v425, %v529
  %v531 = vpop.f32.mrb[0].mxu0
  %532 = vmatprep.mubr.f32.mxu0 %v81
  %533 = vmatmul.mubr.f32.gmra.mrb[0].mxu0 %v80
  %v534 = vpop.f32.mrb[0].mxu0
  %v535 = vadd.f32 %v430, %v534
  %v536 = vpop.f32.mrb[0].mxu0
  %537 = vdwg.mxu0
  %538 = vmatprep.subr.mxu0 0.0
  %539 = vmatpush1.msra.mxu0 %v179
  %540 = vmatprep.subr.mxu0 0.0
  %541 = vmatpush1.msra.mxu0 %v180
  %542 = vmatprep.subr.mxu0 0.0
  %543 = vmatpush1.msra.mxu0 %v181
  %544 = vmatprep.subr.mxu0 0.0
  %545 = vmatpush1.msra.mxu0 %v182
  %546 = vmatprep.subr.mxu0 0.0
  %547 = vmatpush1.msra.mxu0 %v183
  %548 = vmatprep.subr.mxu0 0.0
  %549 = vmatpush1.msra.mxu0 %v184
  %550 = vmatprep.subr.mxu0 0.0
  %551 = vmatpush1.msra.mxu0 %v185
  %552 = vmatprep.subr.mxu0 0.0
  %553 = vmatpush1.msra.mxu0 %v186
  %554 = vmatprep.subr.mxu0 0.0
  %555 = vmatpush1.msra.mxu0 %v187
  %556 = vmatprep.subr.mxu0 0.0
  %557 = vmatpush1.msra.mxu0 %v188
  %558 = vmatprep.subr.mxu0 0.0
  %559 = vmatpush1.msra.mxu0 %v189
  %560 = vmatprep.subr.mxu0 0.0
  %561 = vmatpush1.msra.mxu0 %v190
  %562 = vmatprep.subr.mxu0 0.0
  %563 = vmatpush1.msra.mxu0 0.0
  %564 = vmatprep.subr.mxu0 0.0
  %565 = vmatpush1.msra.mxu0 0.0
  %566 = vmatprep.subr.mxu0 0.0
  %567 = vmatpush1.msra.mxu0 0.0
  %568 = vmatprep.subr.mxu0 0.0
  %569 = vmatpush1.msra.mxu0 0.0
  %570 = vmatprep.subr.mxu0 0.0
  %571 = vmatpush1.msra.mxu0 0.0
  %572 = vmatprep.subr.mxu0 0.0
  %573 = vmatpush1.msra.mxu0 0.0
  %574 = vmatprep.subr.mxu0 0.0
  %575 = vmatpush1.msra.mxu0 0.0
  %576 = vmatprep.subr.mxu0 0.0
  %577 = vmatpush1.msra.mxu0 0.0
  %578 = vmatprep.subr.mxu0 0.0
  %579 = vmatpush1.msra.mxu0 0.0
  %580 = vmatprep.subr.mxu0 0.0
  %581 = vmatpush1.msra.mxu0 0.0
  %582 = vmatprep.subr.mxu0 0.0
  %583 = vmatpush1.msra.mxu0 0.0
  %584 = vmatprep.subr.mxu0 0.0
  %585 = vmatpush1.msra.mxu0 0.0
  %586 = vmatprep.subr.mxu0 0.0
  %587 = vmatpush1.msra.mxu0 0.0
  %588 = vmatprep.subr.mxu0 0.0
  %589 = vmatpush1.msra.mxu0 0.0
  %590 = vmatprep.subr.mxu0 0.0
  %591 = vmatpush1.msra.mxu0 0.0
  %592 = vmatprep.subr.mxu0 0.0
  %593 = vmatpush1.msra.mxu0 0.0
  %594 = vmatprep.subr.mxu0 0.0
  %595 = vmatpush1.msra.mxu0 0.0
  %596 = vmatprep.subr.mxu0 0.0
  %597 = vmatpush1.msra.mxu0 0.0
  %598 = vmatprep.subr.mxu0 0.0
  %599 = vmatpush1.msra.mxu0 0.0
  %600 = vmatprep.subr.mxu0 0.0
  %601 = vmatpush1.msra.mxu0 0.0
  %602 = vmatprep.mubr.f32.mxu0 0.0
  %603 = vmatmul.mubr.f32.gmra.mrb[0].mxu0 %v200
  %v604 = vpop.f32.mrb[0].mxu0
  %v605 = vadd.f32 %v500, %v604
  %v606 = vpop.f32.mrb[0].mxu0
  %607 = vmatprep.mubr.f32.mxu0 0.0
  %608 = vmatmul.mubr.f32.gmra.mrb[0].mxu0 %v203
  %v609 = vpop.f32.mrb[0].mxu0
  %v610 = vadd.f32 %v505, %v609
  %v611 = vpop.f32.mrb[0].mxu0
  %612 = vmatprep.mubr.f32.mxu0 0.0
  %613 = vmatmul.mubr.f32.gmra.mrb[0].mxu0 %v206
  %v614 = vpop.f32.mrb[0].mxu0
  %v615 = vadd.f32 %v510, %v614
  %v616 = vpop.f32.mrb[0].mxu0
  %617 = vmatprep.mubr.f32.mxu0 0.0
  %618 = vmatmul.mubr.f32.gmra.mrb[0].mxu0 %v209
  %v619 = vpop.f32.mrb[0].mxu0
  %v620 = vadd.f32 %v515, %v619
  %v621 = vpop.f32.mrb[0].mxu0
  %622 = vmatprep.mubr.f32.mxu0 0.0
  %623 = vmatmul.mubr.f32.gmra.mrb[0].mxu0 %v212
  %v624 = vpop.f32.mrb[0].mxu0
  %v625 = vadd.f32 %v520, %v624
  %v626 = vpop.f32.mrb[0].mxu0
  %627 = vmatprep.mubr.f32.mxu0 0.0
  %628 = vmatmul.mubr.f32.gmra.mrb[0].mxu0 %v215
  %v629 = vpop.f32.mrb[0].mxu0
  %v630 = vadd.f32 %v525, %v629
  %v631 = vpop.f32.mrb[0].mxu0
  %632 = vmatprep.mubr.f32.mxu0 0.0
  %633 = vmatmul.mubr.f32.gmra.mrb[0].mxu0 %v218
  %v634 = vpop.f32.mrb[0].mxu0
  %v635 = vadd.f32 %v530, %v634
  %v636 = vpop.f32.mrb[0].mxu0
  %637 = vmatprep.mubr.f32.mxu0 0.0
  %638 = vmatmul.mubr.f32.gmra.mrb[0].mxu0 %v221
  %v639 = vpop.f32.mrb[0].mxu0
  %v640 = vadd.f32 %v535, %v639
  %v641 = vpop.f32.mrb[0].mxu0
  %642 = vdwg.mxu0
  %v643 = vmax.f32 %v605, 0.0
  %v644 = vmax.f32 %v610, 0.0
  %v645 = vmax.f32 %v615, 0.0
  %v646 = vmax.f32 %v620, 0.0
  %v647 = vmax.f32 %v625, 0.0
  %v648 = vmax.f32 %v630, 0.0
  %v649 = vmax.f32 %v635, 0.0
  %v650 = vmax.f32 %v640, 0.0
  %vm651 = vcmask 523264
  %v652 = vsel %vm651, %v643, -inf
  %v653 = vrot.slane %v652, 4
  %v654 = vmax.f32 %v652, %v653
  %v655 = vrot.slane %v654, 2
  %v656 = vmax.f32 %v654, %v655
  %v657 = vrot.slane %v656, 1
  %v658 = vmax.f32 %v656, %v657
  %v659 = vsel %vm651, %v644, -inf
  %v660 = vrot.slane %v659, 4
  %v661 = vmax.f32 %v659, %v660
  %v662 = vrot.slane %v661, 2
  %v663 = vmax.f32 %v661, %v662
  %v664 = vrot.slane %v663, 1
  %v665 = vmax.f32 %v663, %v664
  %v666 = vsel %vm651, %v645, -inf
  %v667 = vrot.slane %v666, 4
  %v668 = vmax.f32 %v666, %v667
  %v669 = vrot.slane %v668, 2
  %v670 = vmax.f32 %v668, %v669
  %v671 = vrot.slane %v670, 1
  %v672 = vmax.f32 %v670, %v671
  %v673 = vsel %vm651, %v646, -inf
  %v674 = vrot.slane %v673, 4
  %v675 = vmax.f32 %v673, %v674
  %v676 = vrot.slane %v675, 2
  %v677 = vmax.f32 %v675, %v676
  %v678 = vrot.slane %v677, 1
  %v679 = vmax.f32 %v677, %v678
  %v680 = vsel %vm651, %v647, -inf
  %v681 = vrot.slane %v680, 4
  %v682 = vmax.f32 %v680, %v681
  %v683 = vrot.slane %v682, 2
  %v684 = vmax.f32 %v682, %v683
  %v685 = vrot.slane %v684, 1
  %v686 = vmax.f32 %v684, %v685
  %v687 = vsel %vm651, %v648, -inf
  %v688 = vrot.slane %v687, 4
  %v689 = vmax.f32 %v687, %v688
  %v690 = vrot.slane %v689, 2
  %v691 = vmax.f32 %v689, %v690
  %v692 = vrot.slane %v691, 1
  %v693 = vmax.f32 %v691, %v692
  %v694 = vsel %vm651, %v649, -inf
  %v695 = vrot.slane %v694, 4
  %v696 = vmax.f32 %v694, %v695
  %v697 = vrot.slane %v696, 2
  %v698 = vmax.f32 %v696, %v697
  %v699 = vrot.slane %v698, 1
  %v700 = vmax.f32 %v698, %v699
  %v701 = vsel %vm651, %v650, -inf
  %v702 = vrot.slane %v701, 4
  %v703 = vmax.f32 %v701, %v702
  %v704 = vrot.slane %v703, 2
  %v705 = vmax.f32 %v703, %v704
  %v706 = vrot.slane %v705, 1
  %v707 = vmax.f32 %v705, %v706
  %vm716 = vcmask 1041409
  %v717 = vsel %vm716, %v665, %v658
  %vm718 = vcmask 1042434
  %v719 = vsel %vm718, %v672, %v717
  %vm720 = vcmask 1043459
  %v721 = vsel %vm720, %v679, %v719
  %v722 = vsel %vm716, %v693, %v686
  %v723 = vsel %vm718, %v700, %v722
  %v724 = vsel %vm720, %v707, %v723
  %v727 = vunpack.c.l.s4 1983009808
  %v728 = vunpack.c.0.s8 %v727
  %v729 = vlaneseq
  %v730 = vshrl.u32 %v729, 7
  %v731 = vsub.s32 %v728, %v730
  %v732 = vrot.slane %v721, %v731
  %v735 = vunpack.c.l.s4 1983009808
  %v736 = vunpack.c.0.s8 %v735
  %v737 = vlaneseq
  %v738 = vshrl.u32 %v737, 7
  %v739 = vsub.s32 %v736, %v738
  %v740 = vrot.slane %v724, %v739
  %v741 = vcombine.low %v732, %v740
  %v742 = vcombine.high %v732, %v740
  %v744 = vunpack.c.l.s4 1934713408
  %v745 = vunpack.c.0.s8 %v744
  %v746 = vlaneseq
  %v747 = vshrl.u32 %v746, 7
  %v748 = vsub.s32 %v745, %v747
  %v749 = vrot.slane %v741, %v748
  %v751 = vunpack.c.l.s4 1934713408
  %v752 = vunpack.c.0.s8 %v751
  %v753 = vlaneseq
  %v754 = vshrl.u32 %v753, 7
  %v755 = vsub.s32 %v752, %v754
  %v756 = vrot.slane %v742, %v755
  %v757 = vcombine.high %v749, 0.0
  %v758 = vcombine.high %v756, 0.0
  %760 = vrot.lane.b32.xlu0 %v757, 64
  %v761 = vpop.permute.xlu0 %760
  %764 = vrot.lane.b32.xlu0 %v758, 64
  %v765 = vpop.permute.xlu0 %764
  %v767 = vsel %vm651, %v749, %v761
  %v768 = vsel %vm651, %v756, %v765
  %v769 = vld [vmem:[%s3] sm:$0xff]
  %v770 = vld [vmem:[%s3 + $0x8] sm:$0xff]
  %v771 = vld [vmem:[%s3 + $0x10] sm:$0xff]
  %v772 = vld [vmem:[%s3 + $0x18] sm:$0xff]
  %v773 = vld [vmem:[%s3 + $0x20] sm:$0xff]
  %v774 = vld [vmem:[%s3 + $0x28] sm:$0xff]
  %v775 = vld [vmem:[%s3 + $0x30] sm:$0xff]
  %v776 = vld [vmem:[%s3 + $0x38] sm:$0xff]
  %v777 = vld [vmem:[%s3 + $0x40] sm:$0xff]
  %v778 = vld [vmem:[%s3 + $0x48] sm:$0xff]
  %v779 = vld [vmem:[%s3 + $0x50] sm:$0xff]
  %v780 = vld [vmem:[%s3 + $0x58] sm:$0xff]
  %v781 = vld [vmem:[%s3 + $0x60] sm:$0xff]
  %v782 = vld [vmem:[%s3 + $0x68] sm:$0xff]
  %v783 = vld [vmem:[%s3 + $0x70] sm:$0xff]
  %v784 = vld [vmem:[%s3 + $0x78] sm:$0xff]
  %v785 = vld [vmem:[%s3 + $0x80] sm:$0xff]
  %v786 = vld [vmem:[%s3 + $0x88] sm:$0xff]
  %v787 = vld [vmem:[%s3 + $0x90] sm:$0xff]
  %v788 = vld [vmem:[%s3 + $0x98] sm:$0xff]
  %v789 = vld [vmem:[%s3 + $0xa0] sm:$0xff]
  %v790 = vld [vmem:[%s3 + $0xa8] sm:$0xff]
  %v791 = vld [vmem:[%s3 + $0xb0] sm:$0xff]
  %v792 = vld [vmem:[%s3 + $0xb8] sm:$0xff]
  %v793 = vld [vmem:[%s3 + $0xc0] sm:$0xff]
  %v794 = vld [vmem:[%s3 + $0xc8] sm:$0xff]
  %v795 = vld [vmem:[%s3 + $0xd0] sm:$0xff]
  %v796 = vld [vmem:[%s3 + $0xd8] sm:$0xff]
  %v797 = vld [vmem:[%s3 + $0xe0] sm:$0xff]
  %v798 = vld [vmem:[%s3 + $0xe8] sm:$0xff]
  %v799 = vld [vmem:[%s3 + $0xf0] sm:$0xff]
  %v800 = vld [vmem:[%s3 + $0xf8] sm:$0xff]
  %v801 = vld [vmem:[%s4] sm:$0x1]
  %v803 = vlaneseq
  %v804 = vshrl.u32 %v803, 7
  %v805 = vsub.s32 0, %v804
  %v806 = vrot.slane %v801, %v805
  %808 = vmatprep.subr.mxu0 0.0
  %809 = vmatpush1.msra.mxu0 %v769
  %810 = vmatprep.subr.mxu0 0.0
  %811 = vmatpush1.msra.mxu0 %v770
  %812 = vmatprep.subr.mxu0 0.0
  %813 = vmatpush1.msra.mxu0 %v771
  %814 = vmatprep.subr.mxu0 0.0
  %815 = vmatpush1.msra.mxu0 %v772
  %816 = vmatprep.subr.mxu0 0.0
  %817 = vmatpush1.msra.mxu0 %v773
  %818 = vmatprep.subr.mxu0 0.0
  %819 = vmatpush1.msra.mxu0 %v774
  %820 = vmatprep.subr.mxu0 0.0
  %821 = vmatpush1.msra.mxu0 %v775
  %822 = vmatprep.subr.mxu0 0.0
  %823 = vmatpush1.msra.mxu0 %v776
  %824 = vmatprep.subr.mxu0 0.0
  %825 = vmatpush1.msra.mxu0 %v777
  %826 = vmatprep.subr.mxu0 0.0
  %827 = vmatpush1.msra.mxu0 %v778
  %828 = vmatprep.subr.mxu0 0.0
  %829 = vmatpush1.msra.mxu0 %v779
  %830 = vmatprep.subr.mxu0 0.0
  %831 = vmatpush1.msra.mxu0 %v780
  %832 = vmatprep.subr.mxu0 0.0
  %833 = vmatpush1.msra.mxu0 %v781
  %834 = vmatprep.subr.mxu0 0.0
  %835 = vmatpush1.msra.mxu0 %v782
  %836 = vmatprep.subr.mxu0 0.0
  %837 = vmatpush1.msra.mxu0 %v783
  %838 = vmatprep.subr.mxu0 0.0
  %839 = vmatpush1.msra.mxu0 %v784
  %840 = vmatprep.subr.mxu0 0.0
  %841 = vmatpush1.msra.mxu0 %v785
  %842 = vmatprep.subr.mxu0 0.0
  %843 = vmatpush1.msra.mxu0 %v786
  %844 = vmatprep.subr.mxu0 0.0
  %845 = vmatpush1.msra.mxu0 %v787
  %846 = vmatprep.subr.mxu0 0.0
  %847 = vmatpush1.msra.mxu0 %v788
  %848 = vmatprep.subr.mxu0 0.0
  %849 = vmatpush1.msra.mxu0 %v789
  %850 = vmatprep.subr.mxu0 0.0
  %851 = vmatpush1.msra.mxu0 %v790
  %852 = vmatprep.subr.mxu0 0.0
  %853 = vmatpush1.msra.mxu0 %v791
  %854 = vmatprep.subr.mxu0 0.0
  %855 = vmatpush1.msra.mxu0 %v792
  %856 = vmatprep.subr.mxu0 0.0
  %857 = vmatpush1.msra.mxu0 %v793
  %858 = vmatprep.subr.mxu0 0.0
  %859 = vmatpush1.msra.mxu0 %v794
  %860 = vmatprep.subr.mxu0 0.0
  %861 = vmatpush1.msra.mxu0 %v795
  %862 = vmatprep.subr.mxu0 0.0
  %863 = vmatpush1.msra.mxu0 %v796
  %864 = vmatprep.subr.mxu0 0.0
  %865 = vmatpush1.msra.mxu0 %v797
  %866 = vmatprep.subr.mxu0 0.0
  %867 = vmatpush1.msra.mxu0 %v798
  %868 = vmatprep.subr.mxu0 0.0
  %869 = vmatpush1.msra.mxu0 %v799
  %870 = vmatprep.subr.mxu0 0.0
  %871 = vmatpush1.msra.mxu0 %v800
  %872 = vmatprep.mubr.f32.mxu0 %v768
  %873 = vmatmul.mubr.f32.gmra.mrb[0].mxu0 %v767
  %v874 = vpop.f32.mrb[0].mxu0
  %v875 = vadd.f32 %v806, %v874
  %v876 = vpop.f32.mrb[0].mxu0
  %877 = vdwg.mxu0
  %v878 = vmax.f32 %v875, 0.0
  %v879 = vld [vmem:[%s5] sm:$0x1]
  %v881 = vlaneseq
  %v882 = vshrl.u32 %v881, 7
  %v883 = vsub.s32 0, %v882
  %v884 = vrot.slane %v879, %v883
  %v886 = vmul.f32 %v878, %v884
  %vm887 = vcmask 254976
  %v888 = vsel %vm887, %v886, 0.0
  %889 = vadd.xlane.f32.xlu0 %v888
  %v890 = vpop.xlane.xlu0 %889
  %s891 = sld [smem:[#allocation2]]
  %v892 = vstv %s891
  %v893 = vadd.f32 %v890, %v892
  %vm894 = vcmask 1024
  %895 = vst.msk [vmem:[%s7] sm:$0x3] %vm894, %v893
  // Predicated region
  $region30: #{net4_forward.3} parent=0 // pred_check
    _
  $region31: #{net4_forward.3} parent=0 // pred_check_branch
    %897 = sbr.rel (0) target = $region33
  $region32: #{net4_forward.3} parent=0 // pred_region
    _
  $region33: #{net4_forward.3} parent=0 // pred_fallthru
    _
  // Predicated region
  $region34: #{net4_forward.3} parent=0 // pred_check
    _
  $region35: #{net4_forward.3} parent=0 // pred_check_branch
    %899 = sbr.rel (0) target = $region37
  $region36: #{net4_forward.3} parent=0 // pred_region
    _
  $region37: #{net4_forward.3} parent=0 // pred_fallthru
    _

</llo_original>
